<compile_context>
chip_gen: v5e
topology: v5e:2x2
jax: 0.10.0
libtpu: 0.0.40
codegen_flags: <defaults>
</compile_context>

<pallas_src>
import math

import jax
import jax.numpy as jnp
from jax.experimental import pallas as pl
from jax.experimental.pallas import tpu as pltpu

# ----------------------------- problem sizes --------------------------------
B = 8                       # batch (multiple of f32 sublane height 8)
C_IN, H_IMG, W_IMG = 4, 16, 16
KSZ = 4                     # conv kernel size == stride (non-overlapping)
C1 = 16                     # conv out channels
H_OUT, W_OUT = H_IMG // KSZ, W_IMG // KSZ
P = H_OUT * W_OUT           # 16 conv output positions
K_IN = C_IN * H_IMG * W_IMG            # 1024 = flattened NCHW pixels
CONV_FLAT = P * C1                     # 256 = flattened conv activation
HID = 64                    # neural hidden width
N_ACTIONS = 6               # env actions (== env.n_raw_actions -> no zero-pad)
N_HEADS = N_ACTIONS + 1     # actor logits | critic value (fused head)
N_OBJ, N_FEAT = 4, 6
DL = N_OBJ * N_FEAT         # 24 flattened logic state dim
LH = 32                     # logic-actor / blender / logic-critic hidden
LH3 = 3 * LH                # 96 fused hidden (actor|blender|critic)
N_PREDS = 9                 # number of logic action predicates
N_LOG2 = N_PREDS + 2 + 1    # 12 fused second-layer outputs
EPS = 0.01                  # torch.logit(probs, eps=0.01)
GAMMA = 0.01                # nsfr softor temperature (reference value; safe thanks
                            # to per-group max subtraction inside the kernel)
DUMMY_LOGIT = math.log(EPS / (1.0 - EPS))   # logit of the appended zero-prob column
OUT_W = 128                 # lane-dense output slab width

# env_action_id -> action-predicate indices (BlenderActor._build_action_id_dict
# builds this statically from predicate names; N_PREDS is the dummy index whose
# probability is the appended zero column).
ACTION_PRED_INDICES = {
    0: [N_PREDS],           # no matching predicate -> dummy index
    1: [0, 1],
    2: [2],
    3: [3, 4],
    4: [5, 6],
    5: [7, 8],
}

# --------------------------- packed-slab layouts -----------------------------
# Slab A (256 lanes): folded conv weight + per-(p,c1) conv bias.
R_BCONV = K_IN                     # 1024
SLAB_A_ROWS = K_IN + 8             # 1032 (8-row aligned)
SLAB_A_COLS = CONV_FLAT            # 256
# Slab B (128 lanes): every other weight/bias, 8-row-aligned sections.
R_WFC = 0                          # [256, 64]  FC
R_BFC = R_WFC + CONV_FLAT          # 256
R_WHD = R_BFC + 8                  # 264  [64, 7]   actor|critic head
R_BHD = R_WHD + HID                # 328
R_WL1 = R_BHD + 8                  # 336  [24, 96]  logic-actor|blender|critic L1
R_BL1 = R_WL1 + DL                 # 360
R_WL2 = R_BL1 + 8                  # 368  [96, 12]  block-diagonal L2
R_BL2 = R_WL2 + LH3                # 464
SLAB_B_ROWS = R_BL2 + 8            # 472
SLAB_B_COLS = 128


# ------------------------------ kernel helpers --------------------------------
def _softmax(x):
    m = jnp.max(x, axis=1, keepdims=True)
    e = jnp.exp(x - m)
    return e / jnp.sum(e, axis=1, keepdims=True)


def _logit(p):
    # torch.logit(p, eps=EPS): clamp then log(p / (1 - p)).
    # One log + one (approximate, EUP) reciprocal instead of two logs.
    pc = jnp.clip(p, EPS, 1.0 - EPS)
    return jnp.log(pc * pl.reciprocal(1.0 - pc, approx=True))


def _softor_columns(cols):
    """softor = gamma * logsumexp(x / gamma) over a list of [B,1] columns.

    Per-group max subtraction => exact NSFR gamma=0.01 without f32 overflow.
    """
    if len(cols) == 1:
        return cols[0]
    m = cols[0]
    for c in cols[1:]:
        m = jnp.maximum(m, c)
    s = jnp.exp((cols[0] - m) * (1.0 / GAMMA))
    for c in cols[1:]:
        s = s + jnp.exp((c - m) * (1.0 / GAMMA))
    return m + GAMMA * jnp.log(s)
    # TODO(synk): nsfr's softor also renormalizes by max() when the merged value
    # exceeds 1.0 (a data-dependent batch-coupled branch); not implemented here.


# --------------------------------- kernel -------------------------------------
def fused_kernel(x_ref, logic_ref, slab_a_ref, slab_b_ref, out_ref):
    bsz = x_ref.shape[0]
    x = x_ref[...]                                    # [B, 1024] NCHW-flattened pixels
    logic = logic_ref[...]                            # [B, 24]

    # ---- conv (k=s=4, valid) as one block-structured matmul + bias + ReLU ----
    w_conv = slab_a_ref[0:K_IN, :]                    # [1024, 256]
    b_conv = slab_a_ref[R_BCONV:R_BCONV + 1, :]       # [1, 256]
    conv = jnp.maximum(
        jnp.dot(x, w_conv, preferred_element_type=jnp.float32) + b_conv, 0.0)   # [B,256]

    # ---- neural FC -> ReLU ----
    w_fc = slab_b_ref[R_WFC:R_WFC + CONV_FLAT, 0:HID]
    b_fc = slab_b_ref[R_BFC:R_BFC + 1, 0:HID]
    hid = jnp.maximum(
        jnp.dot(conv, w_fc, preferred_element_type=jnp.float32) + b_fc, 0.0)    # [B,64]

    # ---- neural actor + neural critic heads fused (shared LHS) ----
    w_hd = slab_b_ref[R_WHD:R_WHD + HID, 0:N_HEADS]
    b_hd = slab_b_ref[R_BHD:R_BHD + 1, 0:N_HEADS]
    heads = jnp.dot(hid, w_hd, preferred_element_type=jnp.float32) + b_hd       # [B,7]
    neural_probs = _softmax(heads[:, 0:N_ACTIONS])                              # [B,6]
    neural_value = heads[:, N_ACTIONS:N_ACTIONS + 1]                            # [B,1]

    # ---- logic-state MLPs fused: logic actor | blender | logic critic ----
    w1 = slab_b_ref[R_WL1:R_WL1 + DL, 0:LH3]
    b1 = slab_b_ref[R_BL1:R_BL1 + 1, 0:LH3]
    h1 = jnp.maximum(
        jnp.dot(logic, w1, preferred_element_type=jnp.float32) + b1, 0.0)       # [B,96]
    w2 = slab_b_ref[R_WL2:R_WL2 + LH3, 0:N_LOG2]
    b2 = slab_b_ref[R_BL2:R_BL2 + 1, 0:N_LOG2]
    out2 = jnp.dot(h1, w2, preferred_element_type=jnp.float32) + b2             # [B,12]

    raw_preds = jax.nn.sigmoid(out2[:, 0:N_PREDS])               # logic-actor pred probs
    blend_p = jax.nn.sigmoid(out2[:, N_PREDS:N_PREDS + 2])       # blender probs
    logic_value = out2[:, N_PREDS + 2:N_PREDS + 3]               # logic critic (linear)

    # ---- logic actor: to_action_distribution (logit -> group softor -> softmax) ----
    raw_logits = _logit(raw_preds)                               # [B, 9]
    lane = jax.lax.broadcasted_iota(jnp.int32, (1, N_ACTIONS), 1)
    action_values = jnp.zeros((bsz, N_ACTIONS), jnp.float32)
    for a in range(N_ACTIONS):                                   # static, unrolled at trace
        cols = []
        for j in ACTION_PRED_INDICES[a]:
            if j == N_PREDS:   # appended zero-prob column -> constant logit(0, eps)
                cols.append(jnp.full((bsz, 1), DUMMY_LOGIT, jnp.float32))
            else:
                cols.append(raw_logits[:, j:j + 1])
        v = _softor_columns(cols)                                # [B, 1]
        action_values = action_values + v * (lane == a).astype(jnp.float32)
    logic_probs = _softmax(action_values)                        # [B, 6]

    # ---- blender (blender_mode="logic", blend_function="softmax") ----
    weights = _softmax(_logit(blend_p))                          # [B, 2]

    # ---- blend action distributions and values ----
    w0 = weights[:, 0:1]
    w1b = weights[:, 1:2]
    action_probs = w0 * neural_probs + w1b * logic_probs
    value = w0 * neural_value + w1b * logic_value

    # ---- single lane-dense output slab: [probs(6) | weights(2) | value(1) | 0-pad] ----
    out_ref[...] = jnp.zeros((bsz, OUT_W), jnp.float32)
    out_ref[:, 0:N_ACTIONS] = action_probs
    out_ref[:, N_ACTIONS:N_ACTIONS + 2] = weights
    out_ref[:, N_ACTIONS + 2:N_ACTIONS + 3] = value
    # TODO(synk): Categorical sampling / log_prob / entropy of the sampled action
    # is stochastic and left to the caller (probs + blended value are returned).


# ------------------------------ glue / wrapper --------------------------------
def _spec(shape):
    # All operands are small 2-D arrays: one full-array block, grid=(1,).
    return pl.BlockSpec(shape, lambda *_: (0,) * len(shape))


def make_params():
    """Deterministic synthetic parameters, packed into two lane-dense slabs."""
    keys = jax.random.split(jax.random.PRNGKey(42), 10)

    def dense(k, fan_in, fan_out):
        w = jax.random.normal(k, (fan_in, fan_out), jnp.float32) / jnp.sqrt(fan_in)
        b = jnp.full((1, fan_out), 0.01, jnp.float32)
        return w, b

    w_conv, b_conv = dense(keys[0], KSZ * KSZ * C_IN, C1)
    w_fc, b_fc = dense(keys[1], CONV_FLAT, HID)
    w_act, b_act = dense(keys[2], HID, N_ACTIONS)
    w_crit, b_crit = dense(keys[3], HID, 1)
    w_l1, b_l1 = dense(keys[4], DL, LH)
    w_l2, b_l2 = dense(keys[5], LH, N_PREDS)
    w_b1, b_b1 = dense(keys[6], DL, LH)
    w_b2, b_b2 = dense(keys[7], LH, 2)
    w_c1, b_c1 = dense(keys[8], DL, LH)
    w_c2, b_c2 = dense(keys[9], LH, 1)

    # --- fold the non-overlapping conv + im2col permutation into one matrix so
    #     the runtime needs only a free NCHW reshape of the input. -------------
    # rows of w_big index (c, h, w) of NCHW; cols index (ho, wo, c1) = (p, c1).
    w4 = w_conv.reshape(KSZ, KSZ, C_IN, C1)                  # (kh, kw, c, c1)
    eye_h = jnp.eye(H_OUT, dtype=jnp.float32)
    eye_w = jnp.eye(W_OUT, dtype=jnp.float32)
    w_big = jnp.einsum('xyzd,ae,bf->zaxbyefd', w4, eye_h, eye_w)
    w_big = w_big.reshape(K_IN, CONV_FLAT)                   # [1024, 256]
    b_conv_flat = jnp.tile(b_conv, (1, P))                   # [1, 256] per (p, c1)

    slab_a = jnp.zeros((SLAB_A_ROWS, SLAB_A_COLS), jnp.float32)
    slab_a = slab_a.at[0:K_IN, :].set(w_big)
    slab_a = slab_a.at[R_BCONV:R_BCONV + 1, :].set(b_conv_flat)

    # --- pack every other weight/bias into one 128-lane slab (single DMA). ----
    w_heads = jnp.concatenate([w_act, w_crit], axis=1)           # [64, 7]
    b_heads = jnp.concatenate([b_act, b_crit], axis=1)           # [1, 7]
    w_log1 = jnp.concatenate([w_l1, w_b1, w_c1], axis=1)         # [24, 96]
    b_log1 = jnp.concatenate([b_l1, b_b1, b_c1], axis=1)         # [1, 96]
    w_log2 = jnp.zeros((LH3, N_LOG2), jnp.float32)               # block-diagonal
    w_log2 = w_log2.at[0:LH, 0:N_PREDS].set(w_l2)
    w_log2 = w_log2.at[LH:2 * LH, N_PREDS:N_PREDS + 2].set(w_b2)
    w_log2 = w_log2.at[2 * LH:3 * LH, N_PREDS + 2:N_LOG2].set(w_c2)
    b_log2 = jnp.concatenate([b_l2, b_b2, b_c2], axis=1)         # [1, 12]

    slab_b = jnp.zeros((SLAB_B_ROWS, SLAB_B_COLS), jnp.float32)
    for row, blk in ((R_WFC, w_fc), (R_BFC, b_fc), (R_WHD, w_heads), (R_BHD, b_heads),
                     (R_WL1, w_log1), (R_BL1, b_log1), (R_WL2, w_log2), (R_BL2, b_log2)):
        r, c = blk.shape
        slab_b = slab_b.at[row:row + r, 0:c].set(blk)

    return {"slab_a": slab_a, "slab_b": slab_b}


@jax.jit
def blender_actor_critic_forward(neural_state, logic_state, params):
    # Free reshapes only; all hot-path compute happens inside one Pallas kernel.
    x_flat = neural_state.reshape(neural_state.shape[0], K_IN)
    logic_flat = logic_state.reshape(logic_state.shape[0], DL)
    bsz = x_flat.shape[0]

    out = pl.pallas_call(
        fused_kernel,
        out_shape=jax.ShapeDtypeStruct((bsz, OUT_W), jnp.float32),
        grid=(1,),
        in_specs=[
            _spec((bsz, K_IN)),
            _spec((bsz, DL)),
            _spec((SLAB_A_ROWS, SLAB_A_COLS)),
            _spec((SLAB_B_ROWS, SLAB_B_COLS)),
        ],
        out_specs=_spec((bsz, OUT_W)),
        compiler_params=pltpu.CompilerParams(dimension_semantics=("arbitrary",)),
    )(x_flat, logic_flat, params["slab_a"], params["slab_b"])

    action_probs = out[:, 0:N_ACTIONS]
    weights = out[:, N_ACTIONS:N_ACTIONS + 2]
    value = out[:, N_ACTIONS + 2:N_ACTIONS + 3]
    return action_probs, weights, value


# --------------------------------- main --------------------------------------
if __name__ == "__main__":
    key = jax.random.PRNGKey(0)
    k1, k2 = jax.random.split(key)
    neural_state = jax.random.normal(k1, (B, C_IN, H_IMG, W_IMG), jnp.float32)
    logic_state = jax.random.uniform(k2, (B, N_OBJ, N_FEAT), jnp.float32)

    params = make_params()
    action_probs, weights, value = blender_actor_critic_forward(
        neural_state, logic_state, params)
    jax.block_until_ready((action_probs, weights, value))

    # sanity: shapes, finiteness, proper probability distributions
    assert action_probs.shape == (B, N_ACTIONS)
    assert weights.shape == (B, 2)
    assert value.shape == (B, 1)
    assert bool(jnp.all(jnp.isfinite(action_probs)))
    assert bool(jnp.all(jnp.isfinite(weights)))
    assert bool(jnp.all(jnp.isfinite(value)))
    assert bool(jnp.allclose(jnp.sum(action_probs, axis=1), 1.0, atol=1e-3))
    assert bool(jnp.allclose(jnp.sum(weights, axis=1), 1.0, atol=1e-3))

    print("KERNEL_OK")
</pallas_src>

<mosaic_0001>
module attributes {stable_mosaic.version = 11 : i64} {
  func.func @fused_kernel(%arg0: i32, %arg1: memref<8x1024xf32, #tpu.memory_space<vmem>>, %arg2: memref<8x24xf32, #tpu.memory_space<vmem>>, %arg3: memref<1032x256xf32, #tpu.memory_space<vmem>>, %arg4: memref<472x128xf32, #tpu.memory_space<vmem>>, %arg5: memref<8x128xf32, #tpu.memory_space<vmem>>) attributes {dimension_semantics = [#tpu.dimension_semantics<arbitrary>], iteration_bounds = array<i64: 1>, scalar_prefetch = 0 : i64, scratch_operands = 0 : i64, tpu.core_type = #tpu.core_type<tc>, window_params = [{pipeline_mode = #tpu.pipeline_mode<synchronous>, transform_indices = @transform_0, window_bounds = array<i64: 8, 1024>}, {pipeline_mode = #tpu.pipeline_mode<synchronous>, transform_indices = @transform_1, window_bounds = array<i64: 8, 24>}, {pipeline_mode = #tpu.pipeline_mode<synchronous>, transform_indices = @transform_2, window_bounds = array<i64: 1032, 256>}, {pipeline_mode = #tpu.pipeline_mode<synchronous>, transform_indices = @transform_3, window_bounds = array<i64: 472, 128>}, {pipeline_mode = #tpu.pipeline_mode<synchronous>, transform_indices = @transform_4, window_bounds = array<i64: 8, 128>}]} {
    %c0 = arith.constant 0 : index
    %c0_0 = arith.constant 0 : index
    %0 = vector.load %arg1[%c0, %c0_0] : memref<8x1024xf32, #tpu.memory_space<vmem>>, vector<8x1024xf32>
    %c0_1 = arith.constant 0 : index
    %c0_2 = arith.constant 0 : index
    %1 = vector.load %arg2[%c0_1, %c0_2] : memref<8x24xf32, #tpu.memory_space<vmem>>, vector<8x24xf32>
    %c0_3 = arith.constant 0 : index
    %c0_4 = arith.constant 0 : index
    %2 = vector.load %arg3[%c0_3, %c0_4] : memref<1032x256xf32, #tpu.memory_space<vmem>>, vector<1024x256xf32>
    %c1024 = arith.constant 1024 : index
    %c0_5 = arith.constant 0 : index
    %3 = vector.load %arg3[%c1024, %c0_5] : memref<1032x256xf32, #tpu.memory_space<vmem>>, vector<1x256xf32>
    %cst = arith.constant dense<0.000000e+00> : vector<8x256xf32>
    %4 = tpu.matmul %0, %2, %cst {dimension_numbers = #tpu.dot_dimension_numbers<[1], [0], [0], [1], [0, 0, 1, 1], [], []>} : vector<8x1024xf32>, vector<1024x256xf32>, vector<8x256xf32> -> vector<8x256xf32>
    %5 = vector.broadcast %3 : vector<1x256xf32> to vector<8x256xf32>
    %6 = arith.addf %4, %5 : vector<8x256xf32>
    %cst_6 = arith.constant 0.000000e+00 : f32
    %7 = vector.broadcast %cst_6 : f32 to vector<8x256xf32>
    %8 = arith.maximumf %6, %7 : vector<8x256xf32>
    %c0_7 = arith.constant 0 : index
    %c0_8 = arith.constant 0 : index
    %9 = vector.load %arg4[%c0_7, %c0_8] : memref<472x128xf32, #tpu.memory_space<vmem>>, vector<256x64xf32>
    %c256 = arith.constant 256 : index
    %c0_9 = arith.constant 0 : index
    %10 = vector.load %arg4[%c256, %c0_9] : memref<472x128xf32, #tpu.memory_space<vmem>>, vector<1x64xf32>
    %cst_10 = arith.constant dense<0.000000e+00> : vector<8x64xf32>
    %11 = tpu.matmul %8, %9, %cst_10 {dimension_numbers = #tpu.dot_dimension_numbers<[1], [0], [0], [1], [0, 0, 1, 1], [], []>} : vector<8x256xf32>, vector<256x64xf32>, vector<8x64xf32> -> vector<8x64xf32>
    %12 = vector.broadcast %10 : vector<1x64xf32> to vector<8x64xf32>
    %13 = arith.addf %11, %12 : vector<8x64xf32>
    %cst_11 = arith.constant 0.000000e+00 : f32
    %14 = vector.broadcast %cst_11 : f32 to vector<8x64xf32>
    %15 = arith.maximumf %13, %14 : vector<8x64xf32>
    %c264 = arith.constant 264 : index
    %c0_12 = arith.constant 0 : index
    %16 = vector.load %arg4[%c264, %c0_12] : memref<472x128xf32, #tpu.memory_space<vmem>>, vector<64x7xf32>
    %c328 = arith.constant 328 : index
    %c0_13 = arith.constant 0 : index
    %17 = vector.load %arg4[%c328, %c0_13] : memref<472x128xf32, #tpu.memory_space<vmem>>, vector<1x7xf32>
    %cst_14 = arith.constant dense<0.000000e+00> : vector<8x7xf32>
    %18 = tpu.matmul %15, %16, %cst_14 {dimension_numbers = #tpu.dot_dimension_numbers<[1], [0], [0], [1], [0, 0, 1, 1], [], []>} : vector<8x64xf32>, vector<64x7xf32>, vector<8x7xf32> -> vector<8x7xf32>
    %19 = vector.broadcast %17 : vector<1x7xf32> to vector<8x7xf32>
    %20 = arith.addf %18, %19 : vector<8x7xf32>
    %21 = vector.extract_strided_slice %20 {offsets = [0, 0], sizes = [8, 6], strides = [1, 1]} : vector<8x7xf32> to vector<8x6xf32>
    %cst_15 = arith.constant dense<0xFF800000> : vector<8xf32>
    %22 = vector.multi_reduction <maximumf>, %21, %cst_15 [1] : vector<8x6xf32> to vector<8xf32>
    %23 = vector.shape_cast %22 : vector<8xf32> to vector<8x1xf32>
    %24 = vector.broadcast %23 : vector<8x1xf32> to vector<8x6xf32>
    %25 = arith.subf %21, %24 : vector<8x6xf32>
    %26 = math.exp %25 : vector<8x6xf32>
    %cst_16 = arith.constant dense<0.000000e+00> : vector<8xf32>
    %27 = vector.multi_reduction <add>, %26, %cst_16 [1] : vector<8x6xf32> to vector<8xf32>
    %28 = vector.shape_cast %27 : vector<8xf32> to vector<8x1xf32>
    %29 = vector.broadcast %28 : vector<8x1xf32> to vector<8x6xf32>
    %30 = arith.divf %26, %29 : vector<8x6xf32>
    %31 = vector.extract_strided_slice %20 {offsets = [0, 6], sizes = [8, 1], strides = [1, 1]} : vector<8x7xf32> to vector<8x1xf32>
    %c336 = arith.constant 336 : index
    %c0_17 = arith.constant 0 : index
    %32 = vector.load %arg4[%c336, %c0_17] : memref<472x128xf32, #tpu.memory_space<vmem>>, vector<24x96xf32>
    %c360 = arith.constant 360 : index
    %c0_18 = arith.constant 0 : index
    %33 = vector.load %arg4[%c360, %c0_18] : memref<472x128xf32, #tpu.memory_space<vmem>>, vector<1x96xf32>
    %cst_19 = arith.constant dense<0.000000e+00> : vector<8x96xf32>
    %34 = tpu.matmul %1, %32, %cst_19 {dimension_numbers = #tpu.dot_dimension_numbers<[1], [0], [0], [1], [0, 0, 1, 1], [], []>} : vector<8x24xf32>, vector<24x96xf32>, vector<8x96xf32> -> vector<8x96xf32>
    %35 = vector.broadcast %33 : vector<1x96xf32> to vector<8x96xf32>
    %36 = arith.addf %34, %35 : vector<8x96xf32>
    %cst_20 = arith.constant 0.000000e+00 : f32
    %37 = vector.broadcast %cst_20 : f32 to vector<8x96xf32>
    %38 = arith.maximumf %36, %37 : vector<8x96xf32>
    %c368 = arith.constant 368 : index
    %c0_21 = arith.constant 0 : index
    %39 = vector.load %arg4[%c368, %c0_21] : memref<472x128xf32, #tpu.memory_space<vmem>>, vector<96x12xf32>
    %c464 = arith.constant 464 : index
    %c0_22 = arith.constant 0 : index
    %40 = vector.load %arg4[%c464, %c0_22] : memref<472x128xf32, #tpu.memory_space<vmem>>, vector<1x12xf32>
    %cst_23 = arith.constant dense<0.000000e+00> : vector<8x12xf32>
    %41 = tpu.matmul %38, %39, %cst_23 {dimension_numbers = #tpu.dot_dimension_numbers<[1], [0], [0], [1], [0, 0, 1, 1], [], []>} : vector<8x96xf32>, vector<96x12xf32>, vector<8x12xf32> -> vector<8x12xf32>
    %42 = vector.broadcast %40 : vector<1x12xf32> to vector<8x12xf32>
    %43 = arith.addf %41, %42 : vector<8x12xf32>
    %44 = vector.extract_strided_slice %43 {offsets = [0, 0], sizes = [8, 9], strides = [1, 1]} : vector<8x12xf32> to vector<8x9xf32>
    %45 = arith.negf %44 : vector<8x9xf32>
    %46 = math.exp %45 : vector<8x9xf32>
    %cst_24 = arith.constant 1.000000e+00 : f32
    %47 = vector.broadcast %cst_24 : f32 to vector<8x9xf32>
    %48 = arith.addf %47, %46 : vector<8x9xf32>
    %49 = arith.divf %47, %48 : vector<8x9xf32>
    %50 = vector.extract_strided_slice %43 {offsets = [0, 9], sizes = [8, 2], strides = [1, 1]} : vector<8x12xf32> to vector<8x2xf32>
    %51 = arith.negf %50 : vector<8x2xf32>
    %52 = math.exp %51 : vector<8x2xf32>
    %cst_25 = arith.constant 1.000000e+00 : f32
    %53 = vector.broadcast %cst_25 : f32 to vector<8x2xf32>
    %54 = arith.addf %53, %52 : vector<8x2xf32>
    %55 = arith.divf %53, %54 : vector<8x2xf32>
    %56 = vector.extract_strided_slice %43 {offsets = [0, 11], sizes = [8, 1], strides = [1, 1]} : vector<8x12xf32> to vector<8x1xf32>
    %cst_26 = arith.constant 0.00999999977 : f32
    %cst_27 = arith.constant 9.900000e-01 : f32
    %57 = vector.broadcast %cst_26 : f32 to vector<8x9xf32>
    %58 = arith.maximumf %57, %49 : vector<8x9xf32>
    %59 = vector.broadcast %cst_27 : f32 to vector<8x9xf32>
    %60 = arith.minimumf %59, %58 : vector<8x9xf32>
    %cst_28 = arith.constant 1.000000e+00 : f32
    %61 = vector.broadcast %cst_28 : f32 to vector<8x9xf32>
    %62 = arith.subf %61, %60 : vector<8x9xf32>
    %63 = tpu.reciprocal %62 {approx = true} : vector<8x9xf32> -> vector<8x9xf32>
    %64 = arith.mulf %60, %63 : vector<8x9xf32>
    %65 = math.log %64 : vector<8x9xf32>
    %66 = tpu.iota {dimensions = array<i32: 1>} : vector<1x6xi32>
    %cst_29 = arith.constant 0.000000e+00 : f32
    %67 = vector.broadcast %cst_29 : f32 to vector<8x6xf32>
    %cst_30 = arith.constant -4.595120e+00 : f32
    %68 = vector.broadcast %cst_30 : f32 to vector<8x1xf32>
    %c0_i32 = arith.constant 0 : i32
    %69 = vector.broadcast %c0_i32 : i32 to vector<1x6xi32>
    %70 = arith.cmpi eq, %66, %69 : vector<1x6xi32>
    %71 = arith.extui %70 : vector<1x6xi1> to vector<1x6xi32>
    %72 = arith.sitofp %71 : vector<1x6xi32> to vector<1x6xf32>
    %73 = vector.broadcast %68 : vector<8x1xf32> to vector<8x6xf32>
    %74 = vector.broadcast %72 : vector<1x6xf32> to vector<8x6xf32>
    %75 = arith.mulf %73, %74 : vector<8x6xf32>
    %76 = arith.addf %67, %75 : vector<8x6xf32>
    %77 = vector.extract_strided_slice %65 {offsets = [0, 0], sizes = [8, 1], strides = [1, 1]} : vector<8x9xf32> to vector<8x1xf32>
    %78 = vector.extract_strided_slice %65 {offsets = [0, 1], sizes = [8, 1], strides = [1, 1]} : vector<8x9xf32> to vector<8x1xf32>
    %79 = arith.maximumf %77, %78 : vector<8x1xf32>
    %80 = arith.subf %77, %79 : vector<8x1xf32>
    %cst_31 = arith.constant 1.000000e+02 : f32
    %81 = vector.broadcast %cst_31 : f32 to vector<8x1xf32>
    %82 = arith.mulf %80, %81 : vector<8x1xf32>
    %83 = math.exp %82 : vector<8x1xf32>
    %84 = arith.subf %78, %79 : vector<8x1xf32>
    %cst_32 = arith.constant 1.000000e+02 : f32
    %85 = vector.broadcast %cst_32 : f32 to vector<8x1xf32>
    %86 = arith.mulf %84, %85 : vector<8x1xf32>
    %87 = math.exp %86 : vector<8x1xf32>
    %88 = arith.addf %83, %87 : vector<8x1xf32>
    %89 = math.log %88 : vector<8x1xf32>
    %cst_33 = arith.constant 0.00999999977 : f32
    %90 = vector.broadcast %cst_33 : f32 to vector<8x1xf32>
    %91 = arith.mulf %90, %89 : vector<8x1xf32>
    %92 = arith.addf %79, %91 : vector<8x1xf32>
    %c1_i32 = arith.constant 1 : i32
    %93 = vector.broadcast %c1_i32 : i32 to vector<1x6xi32>
    %94 = arith.cmpi eq, %66, %93 : vector<1x6xi32>
    %95 = arith.extui %94 : vector<1x6xi1> to vector<1x6xi32>
    %96 = arith.sitofp %95 : vector<1x6xi32> to vector<1x6xf32>
    %97 = vector.broadcast %92 : vector<8x1xf32> to vector<8x6xf32>
    %98 = vector.broadcast %96 : vector<1x6xf32> to vector<8x6xf32>
    %99 = arith.mulf %97, %98 : vector<8x6xf32>
    %100 = arith.addf %76, %99 : vector<8x6xf32>
    %101 = vector.extract_strided_slice %65 {offsets = [0, 2], sizes = [8, 1], strides = [1, 1]} : vector<8x9xf32> to vector<8x1xf32>
    %c2_i32 = arith.constant 2 : i32
    %102 = vector.broadcast %c2_i32 : i32 to vector<1x6xi32>
    %103 = arith.cmpi eq, %66, %102 : vector<1x6xi32>
    %104 = arith.extui %103 : vector<1x6xi1> to vector<1x6xi32>
    %105 = arith.sitofp %104 : vector<1x6xi32> to vector<1x6xf32>
    %106 = vector.broadcast %101 : vector<8x1xf32> to vector<8x6xf32>
    %107 = vector.broadcast %105 : vector<1x6xf32> to vector<8x6xf32>
    %108 = arith.mulf %106, %107 : vector<8x6xf32>
    %109 = arith.addf %100, %108 : vector<8x6xf32>
    %110 = vector.extract_strided_slice %65 {offsets = [0, 3], sizes = [8, 1], strides = [1, 1]} : vector<8x9xf32> to vector<8x1xf32>
    %111 = vector.extract_strided_slice %65 {offsets = [0, 4], sizes = [8, 1], strides = [1, 1]} : vector<8x9xf32> to vector<8x1xf32>
    %112 = arith.maximumf %110, %111 : vector<8x1xf32>
    %113 = arith.subf %110, %112 : vector<8x1xf32>
    %cst_34 = arith.constant 1.000000e+02 : f32
    %114 = vector.broadcast %cst_34 : f32 to vector<8x1xf32>
    %115 = arith.mulf %113, %114 : vector<8x1xf32>
    %116 = math.exp %115 : vector<8x1xf32>
    %117 = arith.subf %111, %112 : vector<8x1xf32>
    %cst_35 = arith.constant 1.000000e+02 : f32
    %118 = vector.broadcast %cst_35 : f32 to vector<8x1xf32>
    %119 = arith.mulf %117, %118 : vector<8x1xf32>
    %120 = math.exp %119 : vector<8x1xf32>
    %121 = arith.addf %116, %120 : vector<8x1xf32>
    %122 = math.log %121 : vector<8x1xf32>
    %cst_36 = arith.constant 0.00999999977 : f32
    %123 = vector.broadcast %cst_36 : f32 to vector<8x1xf32>
    %124 = arith.mulf %123, %122 : vector<8x1xf32>
    %125 = arith.addf %112, %124 : vector<8x1xf32>
    %c3_i32 = arith.constant 3 : i32
    %126 = vector.broadcast %c3_i32 : i32 to vector<1x6xi32>
    %127 = arith.cmpi eq, %66, %126 : vector<1x6xi32>
    %128 = arith.extui %127 : vector<1x6xi1> to vector<1x6xi32>
    %129 = arith.sitofp %128 : vector<1x6xi32> to vector<1x6xf32>
    %130 = vector.broadcast %125 : vector<8x1xf32> to vector<8x6xf32>
    %131 = vector.broadcast %129 : vector<1x6xf32> to vector<8x6xf32>
    %132 = arith.mulf %130, %131 : vector<8x6xf32>
    %133 = arith.addf %109, %132 : vector<8x6xf32>
    %134 = vector.extract_strided_slice %65 {offsets = [0, 5], sizes = [8, 1], strides = [1, 1]} : vector<8x9xf32> to vector<8x1xf32>
    %135 = vector.extract_strided_slice %65 {offsets = [0, 6], sizes = [8, 1], strides = [1, 1]} : vector<8x9xf32> to vector<8x1xf32>
    %136 = arith.maximumf %134, %135 : vector<8x1xf32>
    %137 = arith.subf %134, %136 : vector<8x1xf32>
    %cst_37 = arith.constant 1.000000e+02 : f32
    %138 = vector.broadcast %cst_37 : f32 to vector<8x1xf32>
    %139 = arith.mulf %137, %138 : vector<8x1xf32>
    %140 = math.exp %139 : vector<8x1xf32>
    %141 = arith.subf %135, %136 : vector<8x1xf32>
    %cst_38 = arith.constant 1.000000e+02 : f32
    %142 = vector.broadcast %cst_38 : f32 to vector<8x1xf32>
    %143 = arith.mulf %141, %142 : vector<8x1xf32>
    %144 = math.exp %143 : vector<8x1xf32>
    %145 = arith.addf %140, %144 : vector<8x1xf32>
    %146 = math.log %145 : vector<8x1xf32>
    %cst_39 = arith.constant 0.00999999977 : f32
    %147 = vector.broadcast %cst_39 : f32 to vector<8x1xf32>
    %148 = arith.mulf %147, %146 : vector<8x1xf32>
    %149 = arith.addf %136, %148 : vector<8x1xf32>
    %c4_i32 = arith.constant 4 : i32
    %150 = vector.broadcast %c4_i32 : i32 to vector<1x6xi32>
    %151 = arith.cmpi eq, %66, %150 : vector<1x6xi32>
    %152 = arith.extui %151 : vector<1x6xi1> to vector<1x6xi32>
    %153 = arith.sitofp %152 : vector<1x6xi32> to vector<1x6xf32>
    %154 = vector.broadcast %149 : vector<8x1xf32> to vector<8x6xf32>
    %155 = vector.broadcast %153 : vector<1x6xf32> to vector<8x6xf32>
    %156 = arith.mulf %154, %155 : vector<8x6xf32>
    %157 = arith.addf %133, %156 : vector<8x6xf32>
    %158 = vector.extract_strided_slice %65 {offsets = [0, 7], sizes = [8, 1], strides = [1, 1]} : vector<8x9xf32> to vector<8x1xf32>
    %159 = vector.extract_strided_slice %65 {offsets = [0, 8], sizes = [8, 1], strides = [1, 1]} : vector<8x9xf32> to vector<8x1xf32>
    %160 = arith.maximumf %158, %159 : vector<8x1xf32>
    %161 = arith.subf %158, %160 : vector<8x1xf32>
    %cst_40 = arith.constant 1.000000e+02 : f32
    %162 = vector.broadcast %cst_40 : f32 to vector<8x1xf32>
    %163 = arith.mulf %161, %162 : vector<8x1xf32>
    %164 = math.exp %163 : vector<8x1xf32>
    %165 = arith.subf %159, %160 : vector<8x1xf32>
    %cst_41 = arith.constant 1.000000e+02 : f32
    %166 = vector.broadcast %cst_41 : f32 to vector<8x1xf32>
    %167 = arith.mulf %165, %166 : vector<8x1xf32>
    %168 = math.exp %167 : vector<8x1xf32>
    %169 = arith.addf %164, %168 : vector<8x1xf32>
    %170 = math.log %169 : vector<8x1xf32>
    %cst_42 = arith.constant 0.00999999977 : f32
    %171 = vector.broadcast %cst_42 : f32 to vector<8x1xf32>
    %172 = arith.mulf %171, %170 : vector<8x1xf32>
    %173 = arith.addf %160, %172 : vector<8x1xf32>
    %c5_i32 = arith.constant 5 : i32
    %174 = vector.broadcast %c5_i32 : i32 to vector<1x6xi32>
    %175 = arith.cmpi eq, %66, %174 : vector<1x6xi32>
    %176 = arith.extui %175 : vector<1x6xi1> to vector<1x6xi32>
    %177 = arith.sitofp %176 : vector<1x6xi32> to vector<1x6xf32>
    %178 = vector.broadcast %173 : vector<8x1xf32> to vector<8x6xf32>
    %179 = vector.broadcast %177 : vector<1x6xf32> to vector<8x6xf32>
    %180 = arith.mulf %178, %179 : vector<8x6xf32>
    %181 = arith.addf %157, %180 : vector<8x6xf32>
    %cst_43 = arith.constant dense<0xFF800000> : vector<8xf32>
    %182 = vector.multi_reduction <maximumf>, %181, %cst_43 [1] : vector<8x6xf32> to vector<8xf32>
    %183 = vector.shape_cast %182 : vector<8xf32> to vector<8x1xf32>
    %184 = vector.broadcast %183 : vector<8x1xf32> to vector<8x6xf32>
    %185 = arith.subf %181, %184 : vector<8x6xf32>
    %186 = math.exp %185 : vector<8x6xf32>
    %cst_44 = arith.constant dense<0.000000e+00> : vector<8xf32>
    %187 = vector.multi_reduction <add>, %186, %cst_44 [1] : vector<8x6xf32> to vector<8xf32>
    %188 = vector.shape_cast %187 : vector<8xf32> to vector<8x1xf32>
    %189 = vector.broadcast %188 : vector<8x1xf32> to vector<8x6xf32>
    %190 = arith.divf %186, %189 : vector<8x6xf32>
    %cst_45 = arith.constant 0.00999999977 : f32
    %cst_46 = arith.constant 9.900000e-01 : f32
    %191 = vector.broadcast %cst_45 : f32 to vector<8x2xf32>
    %192 = arith.maximumf %191, %55 : vector<8x2xf32>
    %193 = vector.broadcast %cst_46 : f32 to vector<8x2xf32>
    %194 = arith.minimumf %193, %192 : vector<8x2xf32>
    %cst_47 = arith.constant 1.000000e+00 : f32
    %195 = vector.broadcast %cst_47 : f32 to vector<8x2xf32>
    %196 = arith.subf %195, %194 : vector<8x2xf32>
    %197 = tpu.reciprocal %196 {approx = true} : vector<8x2xf32> -> vector<8x2xf32>
    %198 = arith.mulf %194, %197 : vector<8x2xf32>
    %199 = math.log %198 : vector<8x2xf32>
    %cst_48 = arith.constant dense<0xFF800000> : vector<8xf32>
    %200 = vector.multi_reduction <maximumf>, %199, %cst_48 [1] : vector<8x2xf32> to vector<8xf32>
    %201 = vector.shape_cast %200 : vector<8xf32> to vector<8x1xf32>
    %202 = vector.broadcast %201 : vector<8x1xf32> to vector<8x2xf32>
    %203 = arith.subf %199, %202 : vector<8x2xf32>
    %204 = math.exp %203 : vector<8x2xf32>
    %cst_49 = arith.constant dense<0.000000e+00> : vector<8xf32>
    %205 = vector.multi_reduction <add>, %204, %cst_49 [1] : vector<8x2xf32> to vector<8xf32>
    %206 = vector.shape_cast %205 : vector<8xf32> to vector<8x1xf32>
    %207 = vector.broadcast %206 : vector<8x1xf32> to vector<8x2xf32>
    %208 = arith.divf %204, %207 : vector<8x2xf32>
    %209 = vector.extract_strided_slice %208 {offsets = [0, 0], sizes = [8, 1], strides = [1, 1]} : vector<8x2xf32> to vector<8x1xf32>
    %210 = vector.extract_strided_slice %208 {offsets = [0, 1], sizes = [8, 1], strides = [1, 1]} : vector<8x2xf32> to vector<8x1xf32>
    %211 = vector.broadcast %209 : vector<8x1xf32> to vector<8x6xf32>
    %212 = arith.mulf %211, %30 : vector<8x6xf32>
    %213 = vector.broadcast %210 : vector<8x1xf32> to vector<8x6xf32>
    %214 = arith.mulf %213, %190 : vector<8x6xf32>
    %215 = arith.addf %212, %214 : vector<8x6xf32>
    %216 = arith.mulf %209, %31 : vector<8x1xf32>
    %217 = arith.mulf %210, %56 : vector<8x1xf32>
    %218 = arith.addf %216, %217 : vector<8x1xf32>
    %cst_50 = arith.constant 0.000000e+00 : f32
    %219 = vector.broadcast %cst_50 : f32 to vector<8x128xf32>
    %c0_51 = arith.constant 0 : index
    %c0_52 = arith.constant 0 : index
    %220 = vector.load %arg5[%c0_51, %c0_52] : memref<8x128xf32, #tpu.memory_space<vmem>>, vector<8x128xf32>
    tpu.vector_store %arg5[%c0_51, %c0_52], %219 {strides = array<i32>} : memref<8x128xf32, #tpu.memory_space<vmem>>, vector<8x128xf32>,
    %c0_53 = arith.constant 0 : index
    %c0_54 = arith.constant 0 : index
    %221 = vector.load %arg5[%c0_53, %c0_54] : memref<8x128xf32, #tpu.memory_space<vmem>>, vector<8x6xf32>
    tpu.vector_store %arg5[%c0_53, %c0_54], %215 {strides = array<i32>} : memref<8x128xf32, #tpu.memory_space<vmem>>, vector<8x6xf32>,
    %c0_55 = arith.constant 0 : index
    %c6 = arith.constant 6 : index
    %222 = vector.load %arg5[%c0_55, %c6] : memref<8x128xf32, #tpu.memory_space<vmem>>, vector<8x2xf32>
    tpu.vector_store %arg5[%c0_55, %c6], %208 {strides = array<i32>} : memref<8x128xf32, #tpu.memory_space<vmem>>, vector<8x2xf32>,
    %c0_56 = arith.constant 0 : index
    %c8 = arith.constant 8 : index
    %223 = vector.load %arg5[%c0_56, %c8] : memref<8x128xf32, #tpu.memory_space<vmem>>, vector<8x1xf32>
    tpu.vector_store %arg5[%c0_56, %c8], %218 {strides = array<i32>} : memref<8x128xf32, #tpu.memory_space<vmem>>, vector<8x1xf32>,
    return
  }
  func.func @transform_0(%arg0: i32) -> (i32, i32) {
    %c0_i32 = arith.constant 0 : i32
    %c0_i32_0 = arith.constant 0 : i32
    %c0_i32_1 = arith.constant 0 : i32
    return %c0_i32, %c0_i32_0 : i32, i32
  }
  func.func @transform_1(%arg0: i32) -> (i32, i32) {
    %c0_i32 = arith.constant 0 : i32
    %c0_i32_0 = arith.constant 0 : i32
    %c0_i32_1 = arith.constant 0 : i32
    return %c0_i32, %c0_i32_0 : i32, i32
  }
  func.func @transform_2(%arg0: i32) -> (i32, i32) {
    %c0_i32 = arith.constant 0 : i32
    %c0_i32_0 = arith.constant 0 : i32
    %c0_i32_1 = arith.constant 0 : i32
    return %c0_i32, %c0_i32_0 : i32, i32
  }
  func.func @transform_3(%arg0: i32) -> (i32, i32) {
    %c0_i32 = arith.constant 0 : i32
    %c0_i32_0 = arith.constant 0 : i32
    %c0_i32_1 = arith.constant 0 : i32
    return %c0_i32, %c0_i32_0 : i32, i32
  }
  func.func @transform_4(%arg0: i32) -> (i32, i32) {
    %c0_i32 = arith.constant 0 : i32
    %c0_i32_0 = arith.constant 0 : i32
    %c0_i32_1 = arith.constant 0 : i32
    return %c0_i32, %c0_i32_0 : i32, i32
  }
}

</mosaic_0001>

<llo_original>
// kernel: blender_actor_critic_forward.1
$region0: #{blender_actor_critic_forward.1}
  #allocation0 [shape = 'u32[]', space=smem, size = 0x4, offset = 0x4, fixed_abs, tag = 'smem constant byte address 0x4 - core index']
  #allocation1 [shape = 'u32[72,128]{1,0:T(1,128)}', space=vmem, size = 0x9000, scoped, tag = 'internal scratch']
  %s0 = inlined_call_operand.vmem [shape: f32[8,1024], index: 0, kind: input, shape index: {}]
  %s1 = inlined_call_operand.vmem [shape: f32[8,24], index: 1, kind: input, shape index: {}]
  %s2 = inlined_call_operand.hbm [shape: f32[1032,256], index: 2, kind: input, shape index: {}]
  %s3 = inlined_call_operand.hbm [shape: f32[472,128], index: 3, kind: input, shape index: {}]
  %s4 = inlined_call_operand.vmem [shape: f32[8,128], index: 4, kind: output, shape index: {}]
  %s5 = sld [smem:[#allocation0]]
  $region34: #{blender_actor_critic_forward.1} parent=0
    _
  %s7 = ssub.s32 1, %s5
  %s8 = scalar_select 0, %s7, %s5
  $region1: #{blender_actor_critic_forward.1} parent=0
    #allocation2 [shape = 'u8[1056768]{0}', space=vmem, size = 0x102000, scoped, tag = 'input window, operand 2, single buffered']
    #allocation3 [shape = 's32[1]{0}', space=sflag, size = 0x4, scoped, tag = 'scoped memory for blender_actor_critic_forward.1']
    #allocation4 [shape = 'u8[241664]{0}', space=vmem, size = 0x3b000, scoped, tag = 'input window, operand 3, single buffered']
    #allocation5 [shape = 's32[1]{0}', space=sflag, size = 0x4, scoped, tag = 'scoped memory for blender_actor_critic_forward.1']
    %9 = vsyncpa [#allocation3], 0
    %10 = vsyncpa [#allocation5], 0
    // Predicated region
    $region2: #{blender_actor_critic_forward.1} parent=1 // pred_check
      _
    $region3: #{blender_actor_critic_forward.1} parent=1 // pred_check_branch
      %12 = sbr.rel (0) target = $region5
    $region4: #{blender_actor_critic_forward.1} parent=1 // pred_region
      _
    $region5: #{blender_actor_critic_forward.1} parent=1 // pred_fallthru
      _
    // Predicated region
    $region6: #{blender_actor_critic_forward.1} parent=1 // pred_check
      _
    $region7: #{blender_actor_critic_forward.1} parent=1 // pred_check_branch
      %14 = sbr.rel (0) target = $region9
    $region8: #{blender_actor_critic_forward.1} parent=1 // pred_region
      _
    $region9: #{blender_actor_critic_forward.1} parent=1 // pred_fallthru
      _
    // Predicated region
    $region10: #{blender_actor_critic_forward.1} parent=1 // pred_check
      _
    $region11: #{blender_actor_critic_forward.1} parent=1 // pred_check_branch
      %16 = sbr.rel (0) target = $region13
    $region12: #{blender_actor_critic_forward.1} parent=1 // pred_region
      %18 = vsyncadd [#allocation3], 0
      %s19 = sshll.u32 %s2, 4
      %s20 = int_to_ptr.hbm [resolvable:$true] %s19
      %s21 = sshll.u32 [#allocation2], 4
      %s22 = int_to_ptr.vmem [resolvable:$true] %s21
      %27 = dma.hbm_to_vmem [thread:$0]  %s20, 33024, %s22, [#allocation3], 256, 256, 16
    $region13: #{blender_actor_critic_forward.1} parent=1 // pred_fallthru
      _
    // Predicated region
    $region14: #{blender_actor_critic_forward.1} parent=1 // pred_check
      _
    $region15: #{blender_actor_critic_forward.1} parent=1 // pred_check_branch
      %29 = sbr.rel (0) target = $region17
    $region16: #{blender_actor_critic_forward.1} parent=1 // pred_region
      %31 = vsyncadd [#allocation5], 0
      %s32 = sshll.u32 %s3, 4
      %s33 = int_to_ptr.hbm [resolvable:$true] %s32
      %s34 = sshll.u32 [#allocation4], 4
      %s35 = int_to_ptr.vmem [resolvable:$true] %s34
      %40 = dma.hbm_to_vmem [thread:$0]  %s33, 7552, %s35, [#allocation5], 128, 128, 8
    $region17: #{blender_actor_critic_forward.1} parent=1 // pred_fallthru
      _
    // Predicated region
    $region18: #{blender_actor_critic_forward.1} parent=1 // pred_check
      _
    $region19: #{blender_actor_critic_forward.1} parent=1 // pred_check_branch
      %42 = sbr.rel (0) target = $region21
    $region20: #{blender_actor_critic_forward.1} parent=1 // pred_region
      %44 = dma.done [#allocation3], 33024
    $region21: #{blender_actor_critic_forward.1} parent=1 // pred_fallthru
      _
    // Predicated region
    $region22: #{blender_actor_critic_forward.1} parent=1 // pred_check
      _
    $region23: #{blender_actor_critic_forward.1} parent=1 // pred_check_branch
      %46 = sbr.rel (0) target = $region25
    $region24: #{blender_actor_critic_forward.1} parent=1 // pred_region
      %48 = dma.done [#allocation5], 7552
    $region25: #{blender_actor_critic_forward.1} parent=1 // pred_fallthru
      _
    %v49 = vld [vmem:[%s0] sm:$0xff]
    %v50 = vld [vmem:[%s0 + $0x8] sm:$0xff]
    %v51 = vld [vmem:[%s0 + $0x10] sm:$0xff]
    %v52 = vld [vmem:[%s0 + $0x18] sm:$0xff]
    %v53 = vld [vmem:[%s0 + $0x20] sm:$0xff]
    %v54 = vld [vmem:[%s0 + $0x28] sm:$0xff]
    %v55 = vld [vmem:[%s0 + $0x30] sm:$0xff]
    %v56 = vld [vmem:[%s0 + $0x38] sm:$0xff]
    %v57 = vld [vmem:[%s1] sm:$0xff]
    %v58 = vld [vmem:[#allocation2] sm:$0xff]
    %v59 = vld [vmem:[#allocation2 + $0x8] sm:$0xff]
    %v60 = vld [vmem:[#allocation2 + $0x10] sm:$0xff]
    %v61 = vld [vmem:[#allocation2 + $0x18] sm:$0xff]
    %v62 = vld [vmem:[#allocation2 + $0x20] sm:$0xff]
    %v63 = vld [vmem:[#allocation2 + $0x28] sm:$0xff]
    %v64 = vld [vmem:[#allocation2 + $0x30] sm:$0xff]
    %v65 = vld [vmem:[#allocation2 + $0x38] sm:$0xff]
    %v66 = vld [vmem:[#allocation2 + $0x40] sm:$0xff]
    %v67 = vld [vmem:[#allocation2 + $0x48] sm:$0xff]
    %v68 = vld [vmem:[#allocation2 + $0x50] sm:$0xff]
    %v69 = vld [vmem:[#allocation2 + $0x58] sm:$0xff]
    %v70 = vld [vmem:[#allocation2 + $0x60] sm:$0xff]
    %v71 = vld [vmem:[#allocation2 + $0x68] sm:$0xff]
    %v72 = vld [vmem:[#allocation2 + $0x70] sm:$0xff]
    %v73 = vld [vmem:[#allocation2 + $0x78] sm:$0xff]
    %v74 = vld [vmem:[#allocation2 + $0x80] sm:$0xff]
    %v75 = vld [vmem:[#allocation2 + $0x88] sm:$0xff]
    %v76 = vld [vmem:[#allocation2 + $0x90] sm:$0xff]
    %v77 = vld [vmem:[#allocation2 + $0x98] sm:$0xff]
    %v78 = vld [vmem:[#allocation2 + $0xa0] sm:$0xff]
    %v79 = vld [vmem:[#allocation2 + $0xa8] sm:$0xff]
    %v80 = vld [vmem:[#allocation2 + $0xb0] sm:$0xff]
    %v81 = vld [vmem:[#allocation2 + $0xb8] sm:$0xff]
    %v82 = vld [vmem:[#allocation2 + $0xc0] sm:$0xff]
    %v83 = vld [vmem:[#allocation2 + $0xc8] sm:$0xff]
    %v84 = vld [vmem:[#allocation2 + $0xd0] sm:$0xff]
    %v85 = vld [vmem:[#allocation2 + $0xd8] sm:$0xff]
    %v86 = vld [vmem:[#allocation2 + $0xe0] sm:$0xff]
    %v87 = vld [vmem:[#allocation2 + $0xe8] sm:$0xff]
    %v88 = vld [vmem:[#allocation2 + $0xf0] sm:$0xff]
    %v89 = vld [vmem:[#allocation2 + $0xf8] sm:$0xff]
    %v90 = vld [vmem:[#allocation2 + $0x100] sm:$0xff]
    %v91 = vld [vmem:[#allocation2 + $0x108] sm:$0xff]
    %v92 = vld [vmem:[#allocation2 + $0x110] sm:$0xff]
    %v93 = vld [vmem:[#allocation2 + $0x118] sm:$0xff]
    %v94 = vld [vmem:[#allocation2 + $0x120] sm:$0xff]
    %v95 = vld [vmem:[#allocation2 + $0x128] sm:$0xff]
    %v96 = vld [vmem:[#allocation2 + $0x130] sm:$0xff]
    %v97 = vld [vmem:[#allocation2 + $0x138] sm:$0xff]
    %v98 = vld [vmem:[#allocation2 + $0x140] sm:$0xff]
    %v99 = vld [vmem:[#allocation2 + $0x148] sm:$0xff]
    %v100 = vld [vmem:[#allocation2 + $0x150] sm:$0xff]
    %v101 = vld [vmem:[#allocation2 + $0x158] sm:$0xff]
    %v102 = vld [vmem:[#allocation2 + $0x160] sm:$0xff]
    %v103 = vld [vmem:[#allocation2 + $0x168] sm:$0xff]
    %v104 = vld [vmem:[#allocation2 + $0x170] sm:$0xff]
    %v105 = vld [vmem:[#allocation2 + $0x178] sm:$0xff]
    %v106 = vld [vmem:[#allocation2 + $0x180] sm:$0xff]
    %v107 = vld [vmem:[#allocation2 + $0x188] sm:$0xff]
    %v108 = vld [vmem:[#allocation2 + $0x190] sm:$0xff]
    %v109 = vld [vmem:[#allocation2 + $0x198] sm:$0xff]
    %v110 = vld [vmem:[#allocation2 + $0x1a0] sm:$0xff]
    %v111 = vld [vmem:[#allocation2 + $0x1a8] sm:$0xff]
    %v112 = vld [vmem:[#allocation2 + $0x1b0] sm:$0xff]
    %v113 = vld [vmem:[#allocation2 + $0x1b8] sm:$0xff]
    %v114 = vld [vmem:[#allocation2 + $0x1c0] sm:$0xff]
    %v115 = vld [vmem:[#allocation2 + $0x1c8] sm:$0xff]
    %v116 = vld [vmem:[#allocation2 + $0x1d0] sm:$0xff]
    %v117 = vld [vmem:[#allocation2 + $0x1d8] sm:$0xff]
    %v118 = vld [vmem:[#allocation2 + $0x1e0] sm:$0xff]
    %v119 = vld [vmem:[#allocation2 + $0x1e8] sm:$0xff]
    %v120 = vld [vmem:[#allocation2 + $0x1f0] sm:$0xff]
    %v121 = vld [vmem:[#allocation2 + $0x1f8] sm:$0xff]
    %v122 = vld [vmem:[#allocation2 + $0x200] sm:$0xff]
    %v123 = vld [vmem:[#allocation2 + $0x208] sm:$0xff]
    %v124 = vld [vmem:[#allocation2 + $0x210] sm:$0xff]
    %v125 = vld [vmem:[#allocation2 + $0x218] sm:$0xff]
    %v126 = vld [vmem:[#allocation2 + $0x220] sm:$0xff]
    %v127 = vld [vmem:[#allocation2 + $0x228] sm:$0xff]
    %v128 = vld [vmem:[#allocation2 + $0x230] sm:$0xff]
    %v129 = vld [vmem:[#allocation2 + $0x238] sm:$0xff]
    %v130 = vld [vmem:[#allocation2 + $0x240] sm:$0xff]
    %v131 = vld [vmem:[#allocation2 + $0x248] sm:$0xff]
    %v132 = vld [vmem:[#allocation2 + $0x250] sm:$0xff]
    %v133 = vld [vmem:[#allocation2 + $0x258] sm:$0xff]
    %v134 = vld [vmem:[#allocation2 + $0x260] sm:$0xff]
    %v135 = vld [vmem:[#allocation2 + $0x268] sm:$0xff]
    %v136 = vld [vmem:[#allocation2 + $0x270] sm:$0xff]
    %v137 = vld [vmem:[#allocation2 + $0x278] sm:$0xff]
    %v138 = vld [vmem:[#allocation2 + $0x280] sm:$0xff]
    %v139 = vld [vmem:[#allocation2 + $0x288] sm:$0xff]
    %v140 = vld [vmem:[#allocation2 + $0x290] sm:$0xff]
    %v141 = vld [vmem:[#allocation2 + $0x298] sm:$0xff]
    %v142 = vld [vmem:[#allocation2 + $0x2a0] sm:$0xff]
    %v143 = vld [vmem:[#allocation2 + $0x2a8] sm:$0xff]
    %v144 = vld [vmem:[#allocation2 + $0x2b0] sm:$0xff]
    %v145 = vld [vmem:[#allocation2 + $0x2b8] sm:$0xff]
    %v146 = vld [vmem:[#allocation2 + $0x2c0] sm:$0xff]
    %v147 = vld [vmem:[#allocation2 + $0x2c8] sm:$0xff]
    %v148 = vld [vmem:[#allocation2 + $0x2d0] sm:$0xff]
    %v149 = vld [vmem:[#allocation2 + $0x2d8] sm:$0xff]
    %v150 = vld [vmem:[#allocation2 + $0x2e0] sm:$0xff]
    %v151 = vld [vmem:[#allocation2 + $0x2e8] sm:$0xff]
    %v152 = vld [vmem:[#allocation2 + $0x2f0] sm:$0xff]
    %v153 = vld [vmem:[#allocation2 + $0x2f8] sm:$0xff]
    %v154 = vld [vmem:[#allocation2 + $0x300] sm:$0xff]
    %v155 = vld [vmem:[#allocation2 + $0x308] sm:$0xff]
    %v156 = vld [vmem:[#allocation2 + $0x310] sm:$0xff]
    %v157 = vld [vmem:[#allocation2 + $0x318] sm:$0xff]
    %v158 = vld [vmem:[#allocation2 + $0x320] sm:$0xff]
    %v159 = vld [vmem:[#allocation2 + $0x328] sm:$0xff]
    %v160 = vld [vmem:[#allocation2 + $0x330] sm:$0xff]
    %v161 = vld [vmem:[#allocation2 + $0x338] sm:$0xff]
    %v162 = vld [vmem:[#allocation2 + $0x340] sm:$0xff]
    %v163 = vld [vmem:[#allocation2 + $0x348] sm:$0xff]
    %v164 = vld [vmem:[#allocation2 + $0x350] sm:$0xff]
    %v165 = vld [vmem:[#allocation2 + $0x358] sm:$0xff]
    %v166 = vld [vmem:[#allocation2 + $0x360] sm:$0xff]
    %v167 = vld [vmem:[#allocation2 + $0x368] sm:$0xff]
    %v168 = vld [vmem:[#allocation2 + $0x370] sm:$0xff]
    %v169 = vld [vmem:[#allocation2 + $0x378] sm:$0xff]
    %v170 = vld [vmem:[#allocation2 + $0x380] sm:$0xff]
    %v171 = vld [vmem:[#allocation2 + $0x388] sm:$0xff]
    %v172 = vld [vmem:[#allocation2 + $0x390] sm:$0xff]
    %v173 = vld [vmem:[#allocation2 + $0x398] sm:$0xff]
    %v174 = vld [vmem:[#allocation2 + $0x3a0] sm:$0xff]
    %v175 = vld [vmem:[#allocation2 + $0x3a8] sm:$0xff]
    %v176 = vld [vmem:[#allocation2 + $0x3b0] sm:$0xff]
    %v177 = vld [vmem:[#allocation2 + $0x3b8] sm:$0xff]
    %v178 = vld [vmem:[#allocation2 + $0x3c0] sm:$0xff]
    %v179 = vld [vmem:[#allocation2 + $0x3c8] sm:$0xff]
    %v180 = vld [vmem:[#allocation2 + $0x3d0] sm:$0xff]
    %v181 = vld [vmem:[#allocation2 + $0x3d8] sm:$0xff]
    %v182 = vld [vmem:[#allocation2 + $0x3e0] sm:$0xff]
    %v183 = vld [vmem:[#allocation2 + $0x3e8] sm:$0xff]
    %v184 = vld [vmem:[#allocation2 + $0x3f0] sm:$0xff]
    %v185 = vld [vmem:[#allocation2 + $0x3f8] sm:$0xff]
    %v186 = vld [vmem:[#allocation2 + $0x400] sm:$0xff]
    %v187 = vld [vmem:[#allocation2 + $0x408] sm:$0xff]
    %v188 = vld [vmem:[#allocation2 + $0x410] sm:$0xff]
    %v189 = vld [vmem:[#allocation2 + $0x418] sm:$0xff]
    %v190 = vld [vmem:[#allocation2 + $0x420] sm:$0xff]
    %v191 = vld [vmem:[#allocation2 + $0x428] sm:$0xff]
    %v192 = vld [vmem:[#allocation2 + $0x430] sm:$0xff]
    %v193 = vld [vmem:[#allocation2 + $0x438] sm:$0xff]
    %v194 = vld [vmem:[#allocation2 + $0x440] sm:$0xff]
    %v195 = vld [vmem:[#allocation2 + $0x448] sm:$0xff]
    %v196 = vld [vmem:[#allocation2 + $0x450] sm:$0xff]
    %v197 = vld [vmem:[#allocation2 + $0x458] sm:$0xff]
    %v198 = vld [vmem:[#allocation2 + $0x460] sm:$0xff]
    %v199 = vld [vmem:[#allocation2 + $0x468] sm:$0xff]
    %v200 = vld [vmem:[#allocation2 + $0x470] sm:$0xff]
    %v201 = vld [vmem:[#allocation2 + $0x478] sm:$0xff]
    %v202 = vld [vmem:[#allocation2 + $0x480] sm:$0xff]
    %v203 = vld [vmem:[#allocation2 + $0x488] sm:$0xff]
    %v204 = vld [vmem:[#allocation2 + $0x490] sm:$0xff]
    %v205 = vld [vmem:[#allocation2 + $0x498] sm:$0xff]
    %v206 = vld [vmem:[#allocation2 + $0x4a0] sm:$0xff]
    %v207 = vld [vmem:[#allocation2 + $0x4a8] sm:$0xff]
    %v208 = vld [vmem:[#allocation2 + $0x4b0] sm:$0xff]
    %v209 = vld [vmem:[#allocation2 + $0x4b8] sm:$0xff]
    %v210 = vld [vmem:[#allocation2 + $0x4c0] sm:$0xff]
    %v211 = vld [vmem:[#allocation2 + $0x4c8] sm:$0xff]
    %v212 = vld [vmem:[#allocation2 + $0x4d0] sm:$0xff]
    %v213 = vld [vmem:[#allocation2 + $0x4d8] sm:$0xff]
    %v214 = vld [vmem:[#allocation2 + $0x4e0] sm:$0xff]
    %v215 = vld [vmem:[#allocation2 + $0x4e8] sm:$0xff]
    %v216 = vld [vmem:[#allocation2 + $0x4f0] sm:$0xff]
    %v217 = vld [vmem:[#allocation2 + $0x4f8] sm:$0xff]
    %v218 = vld [vmem:[#allocation2 + $0x500] sm:$0xff]
    %v219 = vld [vmem:[#allocation2 + $0x508] sm:$0xff]
    %v220 = vld [vmem:[#allocation2 + $0x510] sm:$0xff]
    %v221 = vld [vmem:[#allocation2 + $0x518] sm:$0xff]
    %v222 = vld [vmem:[#allocation2 + $0x520] sm:$0xff]
    %v223 = vld [vmem:[#allocation2 + $0x528] sm:$0xff]
    %v224 = vld [vmem:[#allocation2 + $0x530] sm:$0xff]
    %v225 = vld [vmem:[#allocation2 + $0x538] sm:$0xff]
    %v226 = vld [vmem:[#allocation2 + $0x540] sm:$0xff]
    %v227 = vld [vmem:[#allocation2 + $0x548] sm:$0xff]
    %v228 = vld [vmem:[#allocation2 + $0x550] sm:$0xff]
    %v229 = vld [vmem:[#allocation2 + $0x558] sm:$0xff]
    %v230 = vld [vmem:[#allocation2 + $0x560] sm:$0xff]
    %v231 = vld [vmem:[#allocation2 + $0x568] sm:$0xff]
    %v232 = vld [vmem:[#allocation2 + $0x570] sm:$0xff]
    %v233 = vld [vmem:[#allocation2 + $0x578] sm:$0xff]
    %v234 = vld [vmem:[#allocation2 + $0x580] sm:$0xff]
    %v235 = vld [vmem:[#allocation2 + $0x588] sm:$0xff]
    %v236 = vld [vmem:[#allocation2 + $0x590] sm:$0xff]
    %v237 = vld [vmem:[#allocation2 + $0x598] sm:$0xff]
    %v238 = vld [vmem:[#allocation2 + $0x5a0] sm:$0xff]
    %v239 = vld [vmem:[#allocation2 + $0x5a8] sm:$0xff]
    %v240 = vld [vmem:[#allocation2 + $0x5b0] sm:$0xff]
    %v241 = vld [vmem:[#allocation2 + $0x5b8] sm:$0xff]
    %v242 = vld [vmem:[#allocation2 + $0x5c0] sm:$0xff]
    %v243 = vld [vmem:[#allocation2 + $0x5c8] sm:$0xff]
    %v244 = vld [vmem:[#allocation2 + $0x5d0] sm:$0xff]
    %v245 = vld [vmem:[#allocation2 + $0x5d8] sm:$0xff]
    %v246 = vld [vmem:[#allocation2 + $0x5e0] sm:$0xff]
    %v247 = vld [vmem:[#allocation2 + $0x5e8] sm:$0xff]
    %v248 = vld [vmem:[#allocation2 + $0x5f0] sm:$0xff]
    %v249 = vld [vmem:[#allocation2 + $0x5f8] sm:$0xff]
    %v250 = vld [vmem:[#allocation2 + $0x600] sm:$0xff]
    %v251 = vld [vmem:[#allocation2 + $0x608] sm:$0xff]
    %v252 = vld [vmem:[#allocation2 + $0x610] sm:$0xff]
    %v253 = vld [vmem:[#allocation2 + $0x618] sm:$0xff]
    %v254 = vld [vmem:[#allocation2 + $0x620] sm:$0xff]
    %v255 = vld [vmem:[#allocation2 + $0x628] sm:$0xff]
    %v256 = vld [vmem:[#allocation2 + $0x630] sm:$0xff]
    %v257 = vld [vmem:[#allocation2 + $0x638] sm:$0xff]
    %v258 = vld [vmem:[#allocation2 + $0x640] sm:$0xff]
    %v259 = vld [vmem:[#allocation2 + $0x648] sm:$0xff]
    %v260 = vld [vmem:[#allocation2 + $0x650] sm:$0xff]
    %v261 = vld [vmem:[#allocation2 + $0x658] sm:$0xff]
    %v262 = vld [vmem:[#allocation2 + $0x660] sm:$0xff]
    %v263 = vld [vmem:[#allocation2 + $0x668] sm:$0xff]
    %v264 = vld [vmem:[#allocation2 + $0x670] sm:$0xff]
    %v265 = vld [vmem:[#allocation2 + $0x678] sm:$0xff]
    %v266 = vld [vmem:[#allocation2 + $0x680] sm:$0xff]
    %v267 = vld [vmem:[#allocation2 + $0x688] sm:$0xff]
    %v268 = vld [vmem:[#allocation2 + $0x690] sm:$0xff]
    %v269 = vld [vmem:[#allocation2 + $0x698] sm:$0xff]
    %v270 = vld [vmem:[#allocation2 + $0x6a0] sm:$0xff]
    %v271 = vld [vmem:[#allocation2 + $0x6a8] sm:$0xff]
    %v272 = vld [vmem:[#allocation2 + $0x6b0] sm:$0xff]
    %v273 = vld [vmem:[#allocation2 + $0x6b8] sm:$0xff]
    %v274 = vld [vmem:[#allocation2 + $0x6c0] sm:$0xff]
    %v275 = vld [vmem:[#allocation2 + $0x6c8] sm:$0xff]
    %v276 = vld [vmem:[#allocation2 + $0x6d0] sm:$0xff]
    %v277 = vld [vmem:[#allocation2 + $0x6d8] sm:$0xff]
    %v278 = vld [vmem:[#allocation2 + $0x6e0] sm:$0xff]
    %v279 = vld [vmem:[#allocation2 + $0x6e8] sm:$0xff]
    %v280 = vld [vmem:[#allocation2 + $0x6f0] sm:$0xff]
    %v281 = vld [vmem:[#allocation2 + $0x6f8] sm:$0xff]
    %v282 = vld [vmem:[#allocation2 + $0x700] sm:$0xff]
    %v283 = vld [vmem:[#allocation2 + $0x708] sm:$0xff]
    %v284 = vld [vmem:[#allocation2 + $0x710] sm:$0xff]
    %v285 = vld [vmem:[#allocation2 + $0x718] sm:$0xff]
    %v286 = vld [vmem:[#allocation2 + $0x720] sm:$0xff]
    %v287 = vld [vmem:[#allocation2 + $0x728] sm:$0xff]
    %v288 = vld [vmem:[#allocation2 + $0x730] sm:$0xff]
    %v289 = vld [vmem:[#allocation2 + $0x738] sm:$0xff]
    %v290 = vld [vmem:[#allocation2 + $0x740] sm:$0xff]
    %v291 = vld [vmem:[#allocation2 + $0x748] sm:$0xff]
    %v292 = vld [vmem:[#allocation2 + $0x750] sm:$0xff]
    %v293 = vld [vmem:[#allocation2 + $0x758] sm:$0xff]
    %v294 = vld [vmem:[#allocation2 + $0x760] sm:$0xff]
    %v295 = vld [vmem:[#allocation2 + $0x768] sm:$0xff]
    %v296 = vld [vmem:[#allocation2 + $0x770] sm:$0xff]
    %v297 = vld [vmem:[#allocation2 + $0x778] sm:$0xff]
    %v298 = vld [vmem:[#allocation2 + $0x780] sm:$0xff]
    %v299 = vld [vmem:[#allocation2 + $0x788] sm:$0xff]
    %v300 = vld [vmem:[#allocation2 + $0x790] sm:$0xff]
    %v301 = vld [vmem:[#allocation2 + $0x798] sm:$0xff]
    %v302 = vld [vmem:[#allocation2 + $0x7a0] sm:$0xff]
    %v303 = vld [vmem:[#allocation2 + $0x7a8] sm:$0xff]
    %v304 = vld [vmem:[#allocation2 + $0x7b0] sm:$0xff]
    %v305 = vld [vmem:[#allocation2 + $0x7b8] sm:$0xff]
    %v306 = vld [vmem:[#allocation2 + $0x7c0] sm:$0xff]
    %v307 = vld [vmem:[#allocation2 + $0x7c8] sm:$0xff]
    %v308 = vld [vmem:[#allocation2 + $0x7d0] sm:$0xff]
    %v309 = vld [vmem:[#allocation2 + $0x7d8] sm:$0xff]
    %v310 = vld [vmem:[#allocation2 + $0x7e0] sm:$0xff]
    %v311 = vld [vmem:[#allocation2 + $0x7e8] sm:$0xff]
    %v312 = vld [vmem:[#allocation2 + $0x7f0] sm:$0xff]
    %v313 = vld [vmem:[#allocation2 + $0x7f8] sm:$0xff]
    %s314 = scalar_lea.vmem [#allocation2], 2048
    %v315 = vld [vmem:[%s314] ss:$8 sm:$0x3]
    %v317 = vperm.slane %v315, 0
    %v318 = vperm.slane %v315, 1
    %321 = vmatpush.msra.mxu0 %v88
    %322 = vmatpush.msra.mxu0 %v86
    %323 = vmatpush.msra.mxu0 %v84
    %324 = vmatpush.msra.mxu0 %v82
    %325 = vmatpush.msra.mxu0 %v80
    %326 = vmatpush.msra.mxu0 %v78
    %327 = vmatpush.msra.mxu0 %v76
    %328 = vmatpush.msra.mxu0 %v74
    %329 = vmatpush.msra.mxu0 %v72
    %330 = vmatpush.msra.mxu0 %v70
    %331 = vmatpush.msra.mxu0 %v68
    %332 = vmatpush.msra.mxu0 %v66
    %333 = vmatpush.msra.mxu0 %v64
    %334 = vmatpush.msra.mxu0 %v62
    %335 = vmatpush.msra.mxu0 %v60
    %336 = vmatpush.msra.mxu0 %v58
    %337 = vmatmul.f32.gmra.mxu0 %v49
    %v338 = vpop.f32.mrf.mxu0
    %v339 = vadd.f32 %v317, %v338
    %340 = vdwg.mxu0
    %341 = vmatpush.msra.mxu0 %v120
    %342 = vmatpush.msra.mxu0 %v118
    %343 = vmatpush.msra.mxu0 %v116
    %344 = vmatpush.msra.mxu0 %v114
    %345 = vmatpush.msra.mxu0 %v112
    %346 = vmatpush.msra.mxu0 %v110
    %347 = vmatpush.msra.mxu0 %v108
    %348 = vmatpush.msra.mxu0 %v106
    %349 = vmatpush.msra.mxu0 %v104
    %350 = vmatpush.msra.mxu0 %v102
    %351 = vmatpush.msra.mxu0 %v100
    %352 = vmatpush.msra.mxu0 %v98
    %353 = vmatpush.msra.mxu0 %v96
    %354 = vmatpush.msra.mxu0 %v94
    %355 = vmatpush.msra.mxu0 %v92
    %356 = vmatpush.msra.mxu0 %v90
    %357 = vmatmul.f32.gmra.mxu0 %v50
    %v358 = vpop.f32.mrf.mxu0
    %v359 = vadd.f32 %v339, %v358
    %360 = vdwg.mxu0
    %361 = vmatpush.msra.mxu0 %v152
    %362 = vmatpush.msra.mxu0 %v150
    %363 = vmatpush.msra.mxu0 %v148
    %364 = vmatpush.msra.mxu0 %v146
    %365 = vmatpush.msra.mxu0 %v144
    %366 = vmatpush.msra.mxu0 %v142
    %367 = vmatpush.msra.mxu0 %v140
    %368 = vmatpush.msra.mxu0 %v138
    %369 = vmatpush.msra.mxu0 %v136
    %370 = vmatpush.msra.mxu0 %v134
    %371 = vmatpush.msra.mxu0 %v132
    %372 = vmatpush.msra.mxu0 %v130
    %373 = vmatpush.msra.mxu0 %v128
    %374 = vmatpush.msra.mxu0 %v126
    %375 = vmatpush.msra.mxu0 %v124
    %376 = vmatpush.msra.mxu0 %v122
    %377 = vmatmul.f32.gmra.mxu0 %v51
    %v378 = vpop.f32.mrf.mxu0
    %v379 = vadd.f32 %v359, %v378
    %380 = vdwg.mxu0
    %381 = vmatpush.msra.mxu0 %v184
    %382 = vmatpush.msra.mxu0 %v182
    %383 = vmatpush.msra.mxu0 %v180
    %384 = vmatpush.msra.mxu0 %v178
    %385 = vmatpush.msra.mxu0 %v176
    %386 = vmatpush.msra.mxu0 %v174
    %387 = vmatpush.msra.mxu0 %v172
    %388 = vmatpush.msra.mxu0 %v170
    %389 = vmatpush.msra.mxu0 %v168
    %390 = vmatpush.msra.mxu0 %v166
    %391 = vmatpush.msra.mxu0 %v164
    %392 = vmatpush.msra.mxu0 %v162
    %393 = vmatpush.msra.mxu0 %v160
    %394 = vmatpush.msra.mxu0 %v158
    %395 = vmatpush.msra.mxu0 %v156
    %396 = vmatpush.msra.mxu0 %v154
    %397 = vmatmul.f32.gmra.mxu0 %v52
    %v398 = vpop.f32.mrf.mxu0
    %v399 = vadd.f32 %v379, %v398
    %400 = vdwg.mxu0
    %401 = vmatpush.msra.mxu0 %v216
    %402 = vmatpush.msra.mxu0 %v214
    %403 = vmatpush.msra.mxu0 %v212
    %404 = vmatpush.msra.mxu0 %v210
    %405 = vmatpush.msra.mxu0 %v208
    %406 = vmatpush.msra.mxu0 %v206
    %407 = vmatpush.msra.mxu0 %v204
    %408 = vmatpush.msra.mxu0 %v202
    %409 = vmatpush.msra.mxu0 %v200
    %410 = vmatpush.msra.mxu0 %v198
    %411 = vmatpush.msra.mxu0 %v196
    %412 = vmatpush.msra.mxu0 %v194
    %413 = vmatpush.msra.mxu0 %v192
    %414 = vmatpush.msra.mxu0 %v190
    %415 = vmatpush.msra.mxu0 %v188
    %416 = vmatpush.msra.mxu0 %v186
    %417 = vmatmul.f32.gmra.mxu0 %v53
    %v418 = vpop.f32.mrf.mxu0
    %v419 = vadd.f32 %v399, %v418
    %420 = vdwg.mxu0
    %421 = vmatpush.msra.mxu0 %v248
    %422 = vmatpush.msra.mxu0 %v246
    %423 = vmatpush.msra.mxu0 %v244
    %424 = vmatpush.msra.mxu0 %v242
    %425 = vmatpush.msra.mxu0 %v240
    %426 = vmatpush.msra.mxu0 %v238
    %427 = vmatpush.msra.mxu0 %v236
    %428 = vmatpush.msra.mxu0 %v234
    %429 = vmatpush.msra.mxu0 %v232
    %430 = vmatpush.msra.mxu0 %v230
    %431 = vmatpush.msra.mxu0 %v228
    %432 = vmatpush.msra.mxu0 %v226
    %433 = vmatpush.msra.mxu0 %v224
    %434 = vmatpush.msra.mxu0 %v222
    %435 = vmatpush.msra.mxu0 %v220
    %436 = vmatpush.msra.mxu0 %v218
    %437 = vmatmul.f32.gmra.mxu0 %v54
    %v438 = vpop.f32.mrf.mxu0
    %v439 = vadd.f32 %v419, %v438
    %440 = vdwg.mxu0
    %441 = vmatpush.msra.mxu0 %v280
    %442 = vmatpush.msra.mxu0 %v278
    %443 = vmatpush.msra.mxu0 %v276
    %444 = vmatpush.msra.mxu0 %v274
    %445 = vmatpush.msra.mxu0 %v272
    %446 = vmatpush.msra.mxu0 %v270
    %447 = vmatpush.msra.mxu0 %v268
    %448 = vmatpush.msra.mxu0 %v266
    %449 = vmatpush.msra.mxu0 %v264
    %450 = vmatpush.msra.mxu0 %v262
    %451 = vmatpush.msra.mxu0 %v260
    %452 = vmatpush.msra.mxu0 %v258
    %453 = vmatpush.msra.mxu0 %v256
    %454 = vmatpush.msra.mxu0 %v254
    %455 = vmatpush.msra.mxu0 %v252
    %456 = vmatpush.msra.mxu0 %v250
    %457 = vmatmul.f32.gmra.mxu0 %v55
    %v458 = vpop.f32.mrf.mxu0
    %v459 = vadd.f32 %v439, %v458
    %460 = vdwg.mxu0
    %461 = vmatpush.msra.mxu0 %v312
    %462 = vmatpush.msra.mxu0 %v310
    %463 = vmatpush.msra.mxu0 %v308
    %464 = vmatpush.msra.mxu0 %v306
    %465 = vmatpush.msra.mxu0 %v304
    %466 = vmatpush.msra.mxu0 %v302
    %467 = vmatpush.msra.mxu0 %v300
    %468 = vmatpush.msra.mxu0 %v298
    %469 = vmatpush.msra.mxu0 %v296
    %470 = vmatpush.msra.mxu0 %v294
    %471 = vmatpush.msra.mxu0 %v292
    %472 = vmatpush.msra.mxu0 %v290
    %473 = vmatpush.msra.mxu0 %v288
    %474 = vmatpush.msra.mxu0 %v286
    %475 = vmatpush.msra.mxu0 %v284
    %476 = vmatpush.msra.mxu0 %v282
    %477 = vmatmul.f32.gmra.mxu0 %v56
    %v478 = vpop.f32.mrf.mxu0
    %v479 = vadd.f32 %v459, %v478
    %480 = vdwg.mxu0
    %481 = vmatpush.msra.mxu0 %v89
    %482 = vmatpush.msra.mxu0 %v87
    %483 = vmatpush.msra.mxu0 %v85
    %484 = vmatpush.msra.mxu0 %v83
    %485 = vmatpush.msra.mxu0 %v81
    %486 = vmatpush.msra.mxu0 %v79
    %487 = vmatpush.msra.mxu0 %v77
    %488 = vmatpush.msra.mxu0 %v75
    %489 = vmatpush.msra.mxu0 %v73
    %490 = vmatpush.msra.mxu0 %v71
    %491 = vmatpush.msra.mxu0 %v69
    %492 = vmatpush.msra.mxu0 %v67
    %493 = vmatpush.msra.mxu0 %v65
    %494 = vmatpush.msra.mxu0 %v63
    %495 = vmatpush.msra.mxu0 %v61
    %496 = vmatpush.msra.mxu0 %v59
    %497 = vmatmul.f32.gmra.mxu0 %v49
    %v498 = vpop.f32.mrf.mxu0
    %v499 = vadd.f32 %v318, %v498
    %500 = vdwg.mxu0
    %501 = vmatpush.msra.mxu0 %v121
    %502 = vmatpush.msra.mxu0 %v119
    %503 = vmatpush.msra.mxu0 %v117
    %504 = vmatpush.msra.mxu0 %v115
    %505 = vmatpush.msra.mxu0 %v113
    %506 = vmatpush.msra.mxu0 %v111
    %507 = vmatpush.msra.mxu0 %v109
    %508 = vmatpush.msra.mxu0 %v107
    %509 = vmatpush.msra.mxu0 %v105
    %510 = vmatpush.msra.mxu0 %v103
    %511 = vmatpush.msra.mxu0 %v101
    %512 = vmatpush.msra.mxu0 %v99
    %513 = vmatpush.msra.mxu0 %v97
    %514 = vmatpush.msra.mxu0 %v95
    %515 = vmatpush.msra.mxu0 %v93
    %516 = vmatpush.msra.mxu0 %v91
    %517 = vmatmul.f32.gmra.mxu0 %v50
    %v518 = vpop.f32.mrf.mxu0
    %v519 = vadd.f32 %v499, %v518
    %520 = vdwg.mxu0
    %521 = vmatpush.msra.mxu0 %v153
    %522 = vmatpush.msra.mxu0 %v151
    %523 = vmatpush.msra.mxu0 %v149
    %524 = vmatpush.msra.mxu0 %v147
    %525 = vmatpush.msra.mxu0 %v145
    %526 = vmatpush.msra.mxu0 %v143
    %527 = vmatpush.msra.mxu0 %v141
    %528 = vmatpush.msra.mxu0 %v139
    %529 = vmatpush.msra.mxu0 %v137
    %530 = vmatpush.msra.mxu0 %v135
    %531 = vmatpush.msra.mxu0 %v133
    %532 = vmatpush.msra.mxu0 %v131
    %533 = vmatpush.msra.mxu0 %v129
    %534 = vmatpush.msra.mxu0 %v127
    %535 = vmatpush.msra.mxu0 %v125
    %536 = vmatpush.msra.mxu0 %v123
    %537 = vmatmul.f32.gmra.mxu0 %v51
    %v538 = vpop.f32.mrf.mxu0
    %v539 = vadd.f32 %v519, %v538
    %540 = vdwg.mxu0
    %541 = vmatpush.msra.mxu0 %v185
    %542 = vmatpush.msra.mxu0 %v183
    %543 = vmatpush.msra.mxu0 %v181
    %544 = vmatpush.msra.mxu0 %v179
    %545 = vmatpush.msra.mxu0 %v177
    %546 = vmatpush.msra.mxu0 %v175
    %547 = vmatpush.msra.mxu0 %v173
    %548 = vmatpush.msra.mxu0 %v171
    %549 = vmatpush.msra.mxu0 %v169
    %550 = vmatpush.msra.mxu0 %v167
    %551 = vmatpush.msra.mxu0 %v165
    %552 = vmatpush.msra.mxu0 %v163
    %553 = vmatpush.msra.mxu0 %v161
    %554 = vmatpush.msra.mxu0 %v159
    %555 = vmatpush.msra.mxu0 %v157
    %556 = vmatpush.msra.mxu0 %v155
    %557 = vmatmul.f32.gmra.mxu0 %v52
    %v558 = vpop.f32.mrf.mxu0
    %v559 = vadd.f32 %v539, %v558
    %560 = vdwg.mxu0
    %561 = vmatpush.msra.mxu0 %v217
    %562 = vmatpush.msra.mxu0 %v215
    %563 = vmatpush.msra.mxu0 %v213
    %564 = vmatpush.msra.mxu0 %v211
    %565 = vmatpush.msra.mxu0 %v209
    %566 = vmatpush.msra.mxu0 %v207
    %567 = vmatpush.msra.mxu0 %v205
    %568 = vmatpush.msra.mxu0 %v203
    %569 = vmatpush.msra.mxu0 %v201
    %570 = vmatpush.msra.mxu0 %v199
    %571 = vmatpush.msra.mxu0 %v197
    %572 = vmatpush.msra.mxu0 %v195
    %573 = vmatpush.msra.mxu0 %v193
    %574 = vmatpush.msra.mxu0 %v191
    %575 = vmatpush.msra.mxu0 %v189
    %576 = vmatpush.msra.mxu0 %v187
    %577 = vmatmul.f32.gmra.mxu0 %v53
    %v578 = vpop.f32.mrf.mxu0
    %v579 = vadd.f32 %v559, %v578
    %580 = vdwg.mxu0
    %581 = vmatpush.msra.mxu0 %v249
    %582 = vmatpush.msra.mxu0 %v247
    %583 = vmatpush.msra.mxu0 %v245
    %584 = vmatpush.msra.mxu0 %v243
    %585 = vmatpush.msra.mxu0 %v241
    %586 = vmatpush.msra.mxu0 %v239
    %587 = vmatpush.msra.mxu0 %v237
    %588 = vmatpush.msra.mxu0 %v235
    %589 = vmatpush.msra.mxu0 %v233
    %590 = vmatpush.msra.mxu0 %v231
    %591 = vmatpush.msra.mxu0 %v229
    %592 = vmatpush.msra.mxu0 %v227
    %593 = vmatpush.msra.mxu0 %v225
    %594 = vmatpush.msra.mxu0 %v223
    %595 = vmatpush.msra.mxu0 %v221
    %596 = vmatpush.msra.mxu0 %v219
    %597 = vmatmul.f32.gmra.mxu0 %v54
    %v598 = vpop.f32.mrf.mxu0
    %v599 = vadd.f32 %v579, %v598
    %600 = vdwg.mxu0
    %601 = vmatpush.msra.mxu0 %v281
    %602 = vmatpush.msra.mxu0 %v279
    %603 = vmatpush.msra.mxu0 %v277
    %604 = vmatpush.msra.mxu0 %v275
    %605 = vmatpush.msra.mxu0 %v273
    %606 = vmatpush.msra.mxu0 %v271
    %607 = vmatpush.msra.mxu0 %v269
    %608 = vmatpush.msra.mxu0 %v267
    %609 = vmatpush.msra.mxu0 %v265
    %610 = vmatpush.msra.mxu0 %v263
    %611 = vmatpush.msra.mxu0 %v261
    %612 = vmatpush.msra.mxu0 %v259
    %613 = vmatpush.msra.mxu0 %v257
    %614 = vmatpush.msra.mxu0 %v255
    %615 = vmatpush.msra.mxu0 %v253
    %616 = vmatpush.msra.mxu0 %v251
    %617 = vmatmul.f32.gmra.mxu0 %v55
    %v618 = vpop.f32.mrf.mxu0
    %v619 = vadd.f32 %v599, %v618
    %620 = vdwg.mxu0
    %621 = vmatpush.msra.mxu0 %v313
    %622 = vmatpush.msra.mxu0 %v311
    %623 = vmatpush.msra.mxu0 %v309
    %624 = vmatpush.msra.mxu0 %v307
    %625 = vmatpush.msra.mxu0 %v305
    %626 = vmatpush.msra.mxu0 %v303
    %627 = vmatpush.msra.mxu0 %v301
    %628 = vmatpush.msra.mxu0 %v299
    %629 = vmatpush.msra.mxu0 %v297
    %630 = vmatpush.msra.mxu0 %v295
    %631 = vmatpush.msra.mxu0 %v293
    %632 = vmatpush.msra.mxu0 %v291
    %633 = vmatpush.msra.mxu0 %v289
    %634 = vmatpush.msra.mxu0 %v287
    %635 = vmatpush.msra.mxu0 %v285
    %636 = vmatpush.msra.mxu0 %v283
    %637 = vmatmul.f32.gmra.mxu0 %v56
    %v638 = vpop.f32.mrf.mxu0
    %v639 = vadd.f32 %v619, %v638
    %640 = vdwg.mxu0
    %v641 = vmax.f32 %v479, 0.0
    %v642 = vmax.f32 %v639, 0.0
    %v643 = vld [vmem:[#allocation4] sm:$0xff]
    %v644 = vld [vmem:[#allocation4 + $0x8] sm:$0xff]
    %v645 = vld [vmem:[#allocation4 + $0x10] sm:$0xff]
    %v646 = vld [vmem:[#allocation4 + $0x18] sm:$0xff]
    %v647 = vld [vmem:[#allocation4 + $0x20] sm:$0xff]
    %v648 = vld [vmem:[#allocation4 + $0x28] sm:$0xff]
    %v649 = vld [vmem:[#allocation4 + $0x30] sm:$0xff]
    %v650 = vld [vmem:[#allocation4 + $0x38] sm:$0xff]
    %v651 = vld [vmem:[#allocation4 + $0x40] sm:$0xff]
    %v652 = vld [vmem:[#allocation4 + $0x48] sm:$0xff]
    %v653 = vld [vmem:[#allocation4 + $0x50] sm:$0xff]
    %v654 = vld [vmem:[#allocation4 + $0x58] sm:$0xff]
    %v655 = vld [vmem:[#allocation4 + $0x60] sm:$0xff]
    %v656 = vld [vmem:[#allocation4 + $0x68] sm:$0xff]
    %v657 = vld [vmem:[#allocation4 + $0x70] sm:$0xff]
    %v658 = vld [vmem:[#allocation4 + $0x78] sm:$0xff]
    %v659 = vld [vmem:[#allocation4 + $0x80] sm:$0xff]
    %v660 = vld [vmem:[#allocation4 + $0x88] sm:$0xff]
    %v661 = vld [vmem:[#allocation4 + $0x90] sm:$0xff]
    %v662 = vld [vmem:[#allocation4 + $0x98] sm:$0xff]
    %v663 = vld [vmem:[#allocation4 + $0xa0] sm:$0xff]
    %v664 = vld [vmem:[#allocation4 + $0xa8] sm:$0xff]
    %v665 = vld [vmem:[#allocation4 + $0xb0] sm:$0xff]
    %v666 = vld [vmem:[#allocation4 + $0xb8] sm:$0xff]
    %v667 = vld [vmem:[#allocation4 + $0xc0] sm:$0xff]
    %v668 = vld [vmem:[#allocation4 + $0xc8] sm:$0xff]
    %v669 = vld [vmem:[#allocation4 + $0xd0] sm:$0xff]
    %v670 = vld [vmem:[#allocation4 + $0xd8] sm:$0xff]
    %v671 = vld [vmem:[#allocation4 + $0xe0] sm:$0xff]
    %v672 = vld [vmem:[#allocation4 + $0xe8] sm:$0xff]
    %v673 = vld [vmem:[#allocation4 + $0xf0] sm:$0xff]
    %v674 = vld [vmem:[#allocation4 + $0xf8] sm:$0xff]
    %v675 = vld [vmem:[#allocation4 + $0x100] sm:$0x1]
    %v676 = vperm.slane %v675, 0
    %677 = vmatpush.msra.mxu0 %v658
    %678 = vmatpush.msra.mxu0 %v657
    %679 = vmatpush.msra.mxu0 %v656
    %680 = vmatpush.msra.mxu0 %v655
    %681 = vmatpush.msra.mxu0 %v654
    %682 = vmatpush.msra.mxu0 %v653
    %683 = vmatpush.msra.mxu0 %v652
    %684 = vmatpush.msra.mxu0 %v651
    %685 = vmatpush.msra.mxu0 %v650
    %686 = vmatpush.msra.mxu0 %v649
    %687 = vmatpush.msra.mxu0 %v648
    %688 = vmatpush.msra.mxu0 %v647
    %689 = vmatpush.msra.mxu0 %v646
    %690 = vmatpush.msra.mxu0 %v645
    %691 = vmatpush.msra.mxu0 %v644
    %692 = vmatpush.msra.mxu0 %v643
    %693 = vmatmul.f32.gmra.mxu0 %v641
    %v694 = vpop.f32.mrf.mxu0
    %v695 = vadd.f32 %v676, %v694
    %696 = vdwg.mxu0
    %697 = vmatpush.msra.mxu0 %v674
    %698 = vmatpush.msra.mxu0 %v673
    %699 = vmatpush.msra.mxu0 %v672
    %700 = vmatpush.msra.mxu0 %v671
    %701 = vmatpush.msra.mxu0 %v670
    %702 = vmatpush.msra.mxu0 %v669
    %703 = vmatpush.msra.mxu0 %v668
    %704 = vmatpush.msra.mxu0 %v667
    %705 = vmatpush.msra.mxu0 %v666
    %706 = vmatpush.msra.mxu0 %v665
    %707 = vmatpush.msra.mxu0 %v664
    %708 = vmatpush.msra.mxu0 %v663
    %709 = vmatpush.msra.mxu0 %v662
    %710 = vmatpush.msra.mxu0 %v661
    %711 = vmatpush.msra.mxu0 %v660
    %712 = vmatpush.msra.mxu0 %v659
    %713 = vmatmul.f32.gmra.mxu0 %v642
    %v714 = vpop.f32.mrf.mxu0
    %v715 = vadd.f32 %v695, %v714
    %716 = vdwg.mxu0
    %v717 = vmax.f32 %v715, 0.0
    %v718 = vld [vmem:[#allocation4 + $0x108] sm:$0xff]
    %v719 = vld [vmem:[#allocation4 + $0x110] sm:$0xff]
    %v720 = vld [vmem:[#allocation4 + $0x118] sm:$0xff]
    %v721 = vld [vmem:[#allocation4 + $0x120] sm:$0xff]
    %v722 = vld [vmem:[#allocation4 + $0x128] sm:$0xff]
    %v723 = vld [vmem:[#allocation4 + $0x130] sm:$0xff]
    %v724 = vld [vmem:[#allocation4 + $0x138] sm:$0xff]
    %v725 = vld [vmem:[#allocation4 + $0x140] sm:$0xff]
    %v726 = vld [vmem:[#allocation4 + $0x148] sm:$0x1]
    %v727 = vperm.slane %v726, 0
    %vm728 = vcmask 523264
    %v730 = vsel %vm728, %v717, 0
    %732 = vmatpush.msra.mxu0 0.0
    %733 = vmatpush.msra.mxu0 0.0
    %734 = vmatpush.msra.mxu0 0.0
    %735 = vmatpush.msra.mxu0 0.0
    %736 = vmatpush.msra.mxu0 0.0
    %737 = vmatpush.msra.mxu0 0.0
    %738 = vmatpush.msra.mxu0 0.0
    %739 = vmatpush.msra.mxu0 0.0
    %740 = vmatpush.msra.mxu0 %v725
    %741 = vmatpush.msra.mxu0 %v724
    %742 = vmatpush.msra.mxu0 %v723
    %743 = vmatpush.msra.mxu0 %v722
    %744 = vmatpush.msra.mxu0 %v721
    %745 = vmatpush.msra.mxu0 %v720
    %746 = vmatpush.msra.mxu0 %v719
    %747 = vmatpush.msra.mxu0 %v718
    %748 = vmatmul.f32.gmra.mxu0 %v730
    %v749 = vpop.f32.mrf.mxu0
    %v750 = vadd.f32 %v727, %v749
    %751 = vdwg.mxu0
    %vm752 = vcmask 48128
    %v753 = vsel %vm752, %v750, -inf
    %754 = vmax.xlane.f32.xlu0 %v753
    %v755 = vpop.xlane.xlu0 %754
    %v756 = vsub.f32 %v750, %v755
    %v757 = vmul.f32 %v756, 1.442695
    %v758 = vpow.pop %v757
    %v759 = vsel %vm752, %v758, 0.0
    %760 = vadd.xlane.f32.xlu0 %v759
    %v761 = vpop.xlane.xlu0 %760
    %v762 = vrcp.pop %v761
    %v763 = vmul.f32 %v761, %v762
    %v764 = vsub.f32 1.0, %v763
    %v765 = vmul.f32 %v762, %v764
    %v766 = vadd.f32 %v762, %v765
    %vm767 = vweird.f32 %v761
    %vm768 = vweird.f32 %v762
    %vm769 = vmor %vm767, %vm768
    %v770 = vsel %vm769, %v762, %v766
    %v771 = vand.u32 2147483647, %v761
    %vm772 = vcmp.eq.f32.partialorder %v771, 8.507059e+37
    %v773 = vand.u32 %v761, 2147483648
    %v774 = vor.u32 1.1754944e-38, %v773
    %v775 = vsel %vm772, %v774, %v770
    %v776 = vmul.f32 %v758, %v775
    %v777 = vld [vmem:[#allocation4 + $0x150] sm:$0xff]
    %v778 = vld [vmem:[#allocation4 + $0x158] sm:$0xff]
    %v779 = vld [vmem:[#allocation4 + $0x160] sm:$0xff]
    %v780 = vld [vmem:[#allocation4 + $0x168] sm:$0x1]
    %v781 = vperm.slane %v780, 0
    %vm782 = vcmask 195584
    %v784 = vsel %vm782, %v57, 0
    %786 = vmatpush.msra.mxu0 0.0
    %787 = vmatpush.msra.mxu0 0.0
    %788 = vmatpush.msra.mxu0 0.0
    %789 = vmatpush.msra.mxu0 0.0
    %790 = vmatpush.msra.mxu0 0.0
    %791 = vmatpush.msra.mxu0 0.0
    %792 = vmatpush.msra.mxu0 0.0
    %793 = vmatpush.msra.mxu0 0.0
    %794 = vmatpush.msra.mxu0 0.0
    %795 = vmatpush.msra.mxu0 0.0
    %796 = vmatpush.msra.mxu0 0.0
    %797 = vmatpush.msra.mxu0 0.0
    %798 = vmatpush.msra.mxu0 0.0
    %799 = vmatpush.msra.mxu0 %v779
    %800 = vmatpush.msra.mxu0 %v778
    %801 = vmatpush.msra.mxu0 %v777
    %802 = vmatmul.f32.gmra.mxu0 %v784
    %v803 = vpop.f32.mrf.mxu0
    %v804 = vadd.f32 %v781, %v803
    %805 = vdwg.mxu0
    %v806 = vmax.f32 %v804, 0.0
    %v807 = vld [vmem:[#allocation4 + $0x170] sm:$0xff]
    %v808 = vld [vmem:[#allocation4 + $0x178] sm:$0xff]
    %v809 = vld [vmem:[#allocation4 + $0x180] sm:$0xff]
    %v810 = vld [vmem:[#allocation4 + $0x188] sm:$0xff]
    %v811 = vld [vmem:[#allocation4 + $0x190] sm:$0xff]
    %v812 = vld [vmem:[#allocation4 + $0x198] sm:$0xff]
    %v813 = vld [vmem:[#allocation4 + $0x1a0] sm:$0xff]
    %v814 = vld [vmem:[#allocation4 + $0x1a8] sm:$0xff]
    %v815 = vld [vmem:[#allocation4 + $0x1b0] sm:$0xff]
    %v816 = vld [vmem:[#allocation4 + $0x1b8] sm:$0xff]
    %v817 = vld [vmem:[#allocation4 + $0x1c0] sm:$0xff]
    %v818 = vld [vmem:[#allocation4 + $0x1c8] sm:$0xff]
    %v819 = vld [vmem:[#allocation4 + $0x1d0] sm:$0x1]
    %v820 = vperm.slane %v819, 0
    %vm821 = vcmask 785408
    %v823 = vsel %vm821, %v806, 0
    %825 = vmatpush.msra.mxu0 0.0
    %826 = vmatpush.msra.mxu0 0.0
    %827 = vmatpush.msra.mxu0 0.0
    %828 = vmatpush.msra.mxu0 0.0
    %829 = vmatpush.msra.mxu0 %v818
    %830 = vmatpush.msra.mxu0 %v817
    %831 = vmatpush.msra.mxu0 %v816
    %832 = vmatpush.msra.mxu0 %v815
    %833 = vmatpush.msra.mxu0 %v814
    %834 = vmatpush.msra.mxu0 %v813
    %835 = vmatpush.msra.mxu0 %v812
    %836 = vmatpush.msra.mxu0 %v811
    %837 = vmatpush.msra.mxu0 %v810
    %838 = vmatpush.msra.mxu0 %v809
    %839 = vmatpush.msra.mxu0 %v808
    %840 = vmatpush.msra.mxu0 %v807
    %841 = vmatmul.f32.gmra.mxu0 %v823
    %v842 = vpop.f32.mrf.mxu0
    %v843 = vadd.f32 %v820, %v842
    %844 = vdwg.mxu0
    %v845 = vxor.u32 %v843, 2147483648
    %v846 = vmul.f32 %v845, 1.442695
    %v847 = vpow.pop %v846
    %v848 = vadd.f32 %v847, 1.0
    %v849 = vrcp.pop %v848
    %v850 = vmul.f32 %v848, %v849
    %v851 = vsub.f32 1.0, %v850
    %v852 = vmul.f32 %v849, %v851
    %v853 = vadd.f32 %v849, %v852
    %vm854 = vweird.f32 %v848
    %vm855 = vweird.f32 %v849
    %vm856 = vmor %vm854, %vm855
    %v857 = vsel %vm856, %v849, %v853
    %v858 = vand.u32 2147483647, %v848
    %vm859 = vcmp.eq.f32.partialorder %v858, 8.507059e+37
    %v860 = vand.u32 %v848, 2147483648
    %v861 = vor.u32 1.1754944e-38, %v860
    %v862 = vsel %vm859, %v861, %v857
    %v863 = vmul.f32 1.0, %v862
    %v864 = vmax.f32 %v863, 0.01
    %v865 = vmin.f32 %v864, 0.99
    %v866 = vsub.f32 1.0, %v865
    %v867 = vrcp.pop %v866
    %v868 = vmul.f32 %v865, %v867
    %v869 = vlog2.pop %v868
    %v870 = vmul.f32 %v869, 0.6931472
    %v871 = vlaneseq
    %v872 = vand.u32 %v871, 127
    %vm873 = vcmp.eq.s32.totalorder %v872, 0
    %v874 = vsel %vm873, 1, 0
    %v875 = vcvt.s32.f32 %v874
    %v876 = vmul.f32 %v875, -4.59512
    %v877 = vadd.f32 %v876, 0.0
    %879 = vrot.lane.b32.xlu0 %v870, 127
    %v880 = vpop.permute.xlu0 %879
    %v882 = vmax.f32 %v870, %v880
    %v883 = vsub.f32 %v870, %v882
    %v884 = vmul.f32 %v883, 100.0
    %v885 = vmul.f32 %v884, 1.442695
    %v886 = vpow.pop %v885
    %888 = vrot.lane.b32.xlu0 %v882, 1
    %v889 = vpop.permute.xlu0 %888
    %v891 = vsub.f32 %v870, %v889
    %v892 = vmul.f32 %v891, 100.0
    %v893 = vmul.f32 %v892, 1.442695
    %v894 = vpow.pop %v893
    %896 = vrot.lane.b32.xlu0 %v894, 127
    %v897 = vpop.permute.xlu0 %896
    %v899 = vadd.f32 %v886, %v897
    %v900 = vlog2.pop %v899
    %v901 = vmul.f32 %v900, 0.6931472
    %v902 = vmul.f32 %v901, 0.01
    %v903 = vadd.f32 %v882, %v902
    %vm904 = vcmp.eq.s32.totalorder %v872, 1
    %v905 = vsel %vm904, 1, 0
    %v906 = vcvt.s32.f32 %v905
    %908 = vset.pattern.permute.xlu0 0
    %909 = vperm.xlu0 %908, %v903
    %v910 = vpop.permute.xlu0 %909
    %v912 = vmul.f32 %v910, %v906
    %v913 = vadd.f32 %v877, %v912
    %vm914 = vcmp.eq.s32.totalorder %v872, 2
    %v915 = vsel %vm914, 1, 0
    %v916 = vcvt.s32.f32 %v915
    %917 = vset.pattern.permute.xlu0 2
    %918 = vperm.xlu0 %917, %v870
    %v919 = vpop.permute.xlu0 %918
    %v921 = vmul.f32 %v919, %v916
    %v922 = vadd.f32 %v913, %v921
    %vm923 = vcmp.eq.s32.totalorder %v872, 3
    %v924 = vsel %vm923, 1, 0
    %v925 = vcvt.s32.f32 %v924
    %926 = vset.pattern.permute.xlu0 3
    %927 = vperm.xlu0 %926, %v903
    %v928 = vpop.permute.xlu0 %927
    %v930 = vmul.f32 %v928, %v925
    %v931 = vadd.f32 %v922, %v930
    %vm932 = vcmp.eq.s32.totalorder %v872, 4
    %v933 = vsel %vm932, 1, 0
    %v934 = vcvt.s32.f32 %v933
    %935 = vset.pattern.permute.xlu0 5
    %936 = vperm.xlu0 %935, %v903
    %v937 = vpop.permute.xlu0 %936
    %v939 = vmul.f32 %v937, %v934
    %v940 = vadd.f32 %v931, %v939
    %vm941 = vcmp.eq.s32.totalorder %v872, 5
    %v942 = vsel %vm941, 1, 0
    %v943 = vcvt.s32.f32 %v942
    %944 = vset.pattern.permute.xlu0 7
    %945 = vperm.xlu0 %944, %v903
    %v946 = vpop.permute.xlu0 %945
    %v948 = vmul.f32 %v946, %v943
    %v949 = vadd.f32 %v940, %v948
    %v950 = vsel %vm752, %v949, -inf
    %951 = vmax.xlane.f32.xlu0 %v950
    %v952 = vpop.xlane.xlu0 %951
    %v953 = vsub.f32 %v949, %v952
    %v954 = vmul.f32 %v953, 1.442695
    %v955 = vpow.pop %v954
    %v956 = vsel %vm752, %v955, 0.0
    %957 = vadd.xlane.f32.xlu0 %v956
    %v958 = vpop.xlane.xlu0 %957
    %v959 = vrcp.pop %v958
    %v960 = vmul.f32 %v958, %v959
    %v961 = vsub.f32 1.0, %v960
    %v962 = vmul.f32 %v959, %v961
    %v963 = vadd.f32 %v959, %v962
    %vm964 = vweird.f32 %v958
    %vm965 = vweird.f32 %v959
    %vm966 = vmor %vm964, %vm965
    %v967 = vsel %vm966, %v959, %v963
    %v968 = vand.u32 2147483647, %v958
    %vm969 = vcmp.eq.f32.partialorder %v968, 8.507059e+37
    %v970 = vand.u32 %v958, 2147483648
    %v971 = vor.u32 1.1754944e-38, %v970
    %v972 = vsel %vm969, %v971, %v967
    %v973 = vmul.f32 %v955, %v972
    %vm974 = vcmask 89160
    %v975 = vsel %vm974, %v870, -inf
    %976 = vmax.xlane.f32.xlu0 %v975
    %v977 = vpop.xlane.xlu0 %976
    %v978 = vsub.f32 %v870, %v977
    %v979 = vmul.f32 %v978, 1.442695
    %v980 = vpow.pop %v979
    %982 = vrot.lane.b32.xlu0 %v980, 119
    %v983 = vpop.permute.xlu0 %982
    %vm985 = vcmask 15360
    %v986 = vsel %vm985, %v983, 0.0
    %987 = vadd.xlane.f32.xlu0 %v986
    %v988 = vpop.xlane.xlu0 %987
    %v989 = vrcp.pop %v988
    %v990 = vmul.f32 %v988, %v989
    %v991 = vsub.f32 1.0, %v990
    %v992 = vmul.f32 %v989, %v991
    %v993 = vadd.f32 %v989, %v992
    %vm994 = vweird.f32 %v988
    %vm995 = vweird.f32 %v989
    %vm996 = vmor %vm994, %vm995
    %v997 = vsel %vm996, %v989, %v993
    %v998 = vand.u32 2147483647, %v988
    %vm999 = vcmp.eq.f32.partialorder %v998, 8.507059e+37
    %v1000 = vand.u32 %v988, 2147483648
    %v1001 = vor.u32 1.1754944e-38, %v1000
    %v1002 = vsel %vm999, %v1001, %v997
    %v1003 = vmul.f32 %v980, %v1002
    %1005 = vset.pattern.permute.xlu0 9
    %1006 = vperm.xlu0 %1005, %v1003
    %v1007 = vpop.permute.xlu0 %1006
    %v1009 = vmul.f32 %v1007, %v776
    %1010 = vset.pattern.permute.xlu0 10
    %1011 = vperm.xlu0 %1010, %v1003
    %v1012 = vpop.permute.xlu0 %1011
    %v1014 = vmul.f32 %v1012, %v973
    %v1015 = vadd.f32 %v1009, %v1014
    %1017 = vrot.lane.b32.xlu0 %v750, 3
    %v1018 = vpop.permute.xlu0 %1017
    %v1020 = vmul.f32 %v1003, %v1018
    %1022 = vrot.lane.b32.xlu0 %v843, 127
    %v1023 = vpop.permute.xlu0 %1022
    %v1025 = vmul.f32 %v1003, %v1023
    %1027 = vrot.lane.b32.xlu0 %v1025, 127
    %v1028 = vpop.permute.xlu0 %1027
    %v1030 = vadd.f32 %v1020, %v1028
    %1031 = vst [vmem:[%s4] sm:$0xff] 0.0
    %1032 = vst.msk [vmem:[%s4] sm:$0xff] %vm752, %v1015
    %1033 = vrot.lane.b32.xlu0 %v1003, 125
    %v1034 = vpop.permute.xlu0 %1033
    %vm1036 = vcmask 64560
    %1037 = vst.msk [vmem:[%s4] sm:$0xff] %vm1036, %v1034
    %1039 = vrot.lane.b32.xlu0 %v1030, 127
    %v1040 = vpop.permute.xlu0 %1039
    %vm1042 = vcmask 72768
    %1043 = vst.msk [vmem:[%s4] sm:$0xff] %vm1042, %v1040
    // Predicated region
    $region26: #{blender_actor_critic_forward.1} parent=1 // pred_check
      _
    $region27: #{blender_actor_critic_forward.1} parent=1 // pred_check_branch
      %1045 = sbr.rel (0) target = $region29
    $region28: #{blender_actor_critic_forward.1} parent=1 // pred_region
      _
    $region29: #{blender_actor_critic_forward.1} parent=1 // pred_fallthru
      _
    // Predicated region
    $region30: #{blender_actor_critic_forward.1} parent=1 // pred_check
      _
    $region31: #{blender_actor_critic_forward.1} parent=1 // pred_check_branch
      %1047 = sbr.rel (0) target = $region33
    $region32: #{blender_actor_critic_forward.1} parent=1 // pred_region
      _
    $region33: #{blender_actor_critic_forward.1} parent=1 // pred_fallthru
      _
    %1048 = vsyncpa [#allocation3], 1
    %1049 = vsyncpa [#allocation5], 1

</llo_original>
